<compile_context>
chip_gen: v6e
topology: v6e:2x2x1
jax: 0.10.0
libtpu: 0.0.40
codegen_flags: <defaults>
</compile_context>

<pallas_src>
import functools
import math

import jax
import jax.numpy as jnp
from jax.experimental import pallas as pl
from jax.experimental.pallas import tpu as pltpu

_LANE = 128
_SUBLANE = 8
_NEG_LARGE = -1e30  # finite "-inf": exp underflows to 0, avoids inf/NaN corner cases


def _cdiv(a, b):
    return -(-a // b)


def _round_up(x, m):
    return _cdiv(x, m) * m


def _vmem_budget_bytes():
    """Usable scoped-VMEM budget; conservative fallback is safe on every TPU gen."""
    try:
        cap = int(pltpu.get_tpu_info().vmem_capacity_bytes)
    except Exception:
        cap = 64 * 1024 * 1024  # v7x physical VMEM (smallest of v5e/v6e/v7x)
    return int(cap * 0.75)


def _tb_candidates(B, block_b):
    if block_b is not None:
        return [int(block_b)]
    if B <= _SUBLANE:
        return [B]  # block == full batch dim: no padding, no OOB at all
    # >= 2 grid steps so v7x's second TensorCore has work; near-exact split, mult of 8.
    top = min(512, _round_up(_cdiv(B, 2), _SUBLANE))
    cands = [top]
    t = 256
    while t >= _SUBLANE:
        if t < top:
            cands.append(t)
        t //= 2
    return cands


def _plan(B, F, N, budget, x_itemsize, *, block_b=None, block_k=None):
    """Pick (tb[, tk]) so the working set fits the per-generation VMEM budget."""
    n_pad = _round_up(max(N, 1), _LANE)

    def out_and_bias(tb):
        # logits + probs (f32, double-buffered) + bias block
        return 4 * tb * n_pad * 4 + _SUBLANE * n_pad * 4

    cands = _tb_candidates(B, block_b)

    if block_k is None:
        def need_single(tb):
            return (2 * tb * F * x_itemsize      # x tiles, native dtype, double-buffered
                    + F * n_pad * 2              # W, bf16, resident (single-buffered)
                    + out_and_bias(tb))
        for tb in cands:
            need = need_single(tb)
            if need + (2 << 20) <= budget:
                return dict(k_tiled=False, tb=tb, n_pad=n_pad, need=need)

    # --- K-tiled fallback (or explicitly requested via block_k) ------------------
    tb = None
    for cand in cands:
        if out_and_bias(cand) + cand * n_pad * 4 <= budget // 3:
            tb = cand
            break
    if tb is None:
        tb = cands[-1]
    fixed = out_and_bias(tb) + tb * n_pad * 4    # outputs + bias + f32 accumulator
    per_k = 2 * tb * x_itemsize + 2 * n_pad * 2  # x (dbl-buf) + W (bf16, dbl-buf) per K
    if block_k is not None:
        tk = _round_up(int(block_k), _LANE)
    else:
        tk = max(_LANE, ((budget - fixed - (2 << 20)) // per_k) // _LANE * _LANE)
    tk = min(tk, _round_up(F, _LANE))
    nk = _cdiv(F, tk)
    if block_k is None:
        tk = _round_up(_cdiv(F, nk), _LANE)      # re-balance K blocks near-evenly
        nk = _cdiv(F, tk)
    need = fixed + per_k * tk
    return dict(k_tiled=True, tb=tb, tk=tk, nk=nk, n_pad=n_pad, need=need)


def _resident_spec(shape, index_map, single_buffer):
    """BlockSpec for a block whose index_map is constant (never re-fetched)."""
    if single_buffer:
        try:
            return pl.BlockSpec(shape, index_map, pipeline_mode=pl.Buffered(1))
        except TypeError:
            pass
    return pl.BlockSpec(shape, index_map)


def _fused_kernel(x_ref, w_ref, b_ref, logits_ref, probs_ref):
    # x: (tb, F) native dtype; w: (F, n_pad) bf16 resident; b: (1, n_pad) f32.
    # Padded class lanes of b carry -1e30, so they vanish in the softmax (exp -> 0).
    x = x_ref[...].astype(jnp.bfloat16)
    logits = jnp.dot(x, w_ref[...], preferred_element_type=jnp.float32) + b_ref[...]
    logits_ref[...] = logits.astype(logits_ref.dtype)

    m = jnp.max(logits, axis=-1, keepdims=True)
    e = jnp.exp(logits - m)
    denom = jnp.sum(e, axis=-1, keepdims=True)
    probs_ref[...] = (e * pl.reciprocal(denom, approx=True)).astype(probs_ref.dtype)


def _fused_kernel_ktiled(x_ref, w_ref, b_ref, logits_ref, probs_ref, acc_ref, *, k_rem):
    k = pl.program_id(1)
    nk = pl.num_programs(1)

    @pl.when(k == 0)
    def _():
        acc_ref[...] = jnp.zeros_like(acc_ref)

    x = x_ref[...]
    if k_rem:  # static: last K block is ragged -> zero the out-of-bounds feature columns
        col = jax.lax.broadcasted_iota(jnp.int32, x.shape, 1)
        limit = jnp.where(k == nk - 1, k_rem, x.shape[1])
        x = jnp.where(col < limit, x, jnp.zeros((), x.dtype))

    acc_ref[...] += jnp.dot(x.astype(jnp.bfloat16), w_ref[...],
                            preferred_element_type=jnp.float32)

    @pl.when(k == nk - 1)
    def _():
        logits = acc_ref[...] + b_ref[...]
        logits_ref[...] = logits.astype(logits_ref.dtype)
        m = jnp.max(logits, axis=-1, keepdims=True)
        e = jnp.exp(logits - m)
        denom = jnp.sum(e, axis=-1, keepdims=True)
        probs_ref[...] = (e * pl.reciprocal(denom, approx=True)).astype(probs_ref.dtype)


def base_model_forward(x_nchw, weight, bias, *, block_b=None, block_k=None):
    """Pallas forward pass.

    Args:
      x_nchw:  (B, C, H, W) input (NCHW, PyTorch convention).
      weight:  (C*H*W, num_classes).
      bias:    (num_classes,).
      block_b / block_k: optional tile overrides (block_k forces the K-tiled path).

    Returns:
      (logits, softmax) each of shape (B, num_classes), float32.
    """
    B = int(x_nchw.shape[0])
    F = int(math.prod(x_nchw.shape[1:]))
    N = int(weight.shape[-1])
    assert int(weight.shape[0]) == F, "weight must have shape (C*H*W, num_classes)"

    budget = _vmem_budget_bytes()
    x_itemsize = jnp.dtype(x_nchw.dtype).itemsize
    plan = _plan(B, F, N, budget, x_itemsize, block_b=block_b, block_k=block_k)
    tb, n_pad = plan["tb"], plan["n_pad"]

    # Glue: reshape only (no cast, no pad) for the activation; cast/pad the parameters.
    x_flat = x_nchw.reshape(B, F)
    w = weight.astype(jnp.bfloat16)
    b2d = bias.reshape(1, N).astype(jnp.float32)
    if n_pad != N:
        w = jnp.pad(w, ((0, 0), (0, n_pad - N)))
        # Fold the class-padding mask into the bias: padded lanes -> -1e30.
        b2d = jnp.pad(b2d, ((0, 0), (0, n_pad - N)), constant_values=_NEG_LARGE)

    grid_b = _cdiv(B, tb)
    out_shapes = (jax.ShapeDtypeStruct((B, n_pad), jnp.float32),
                  jax.ShapeDtypeStruct((B, n_pad), jnp.float32))
    cost = pl.CostEstimate(
        flops=2 * B * F * n_pad,
        transcendentals=B * n_pad,
        bytes_accessed=(B * F * x_itemsize + F * n_pad * 2 + n_pad * 4
                        + 2 * B * n_pad * 4),
    )
    vmem_limit = int(min(budget, max(int(plan["need"] * 1.5) + (2 << 20), 32 << 20)))

    def run(single_buffer_resident):
        if not plan["k_tiled"]:
            w_in = w
            in_specs = [
                pl.BlockSpec((tb, F), lambda i: (i, 0)),                     # x: batch-tiled
                _resident_spec((F, n_pad), lambda i: (0, 0),
                               single_buffer_resident),                      # W: resident
                _resident_spec((1, n_pad), lambda i: (0, 0),
                               single_buffer_resident),                      # bias: resident
            ]
            out_specs = (pl.BlockSpec((tb, n_pad), lambda i: (i, 0)),
                         pl.BlockSpec((tb, n_pad), lambda i: (i, 0)))
            grid = (grid_b,)
            scratch = []
            kernel = _fused_kernel
            semantics = ("parallel",)
        else:
            tk, nk = plan["tk"], plan["nk"]
            f_pad = tk * nk
            # Zero-pad W along K so ragged-K contributions are exactly zero.
            w_in = jnp.pad(w, ((0, f_pad - F), (0, 0))) if f_pad != F else w
            k_rem = F - (nk - 1) * tk
            k_rem = 0 if k_rem == tk else k_rem
            in_specs = [
                pl.BlockSpec((tb, tk), lambda i, k: (i, k)),                 # x: (b, k) tiled
                pl.BlockSpec((tk, n_pad), lambda i, k: (k, 0)),              # W: streams over k
                _resident_spec((1, n_pad), lambda i, k: (0, 0),
                               single_buffer_resident),                      # bias: resident
            ]
            out_specs = (pl.BlockSpec((tb, n_pad), lambda i, k: (i, 0)),
                         pl.BlockSpec((tb, n_pad), lambda i, k: (i, 0)))
            grid = (grid_b, nk)
            scratch = [pltpu.VMEM((tb, n_pad), jnp.float32)]                 # f32 accumulator
            kernel = functools.partial(_fused_kernel_ktiled, k_rem=k_rem)
            semantics = ("parallel", "arbitrary")

        return pl.pallas_call(
            kernel,
            out_shape=out_shapes,
            grid_spec=pltpu.PrefetchScalarGridSpec(
                num_scalar_prefetch=0,
                grid=grid,
                in_specs=in_specs,
                out_specs=out_specs,
                scratch_shapes=scratch,
            ),
            compiler_params=pltpu.CompilerParams(
                dimension_semantics=semantics,
                vmem_limit_bytes=vmem_limit,
            ),
            cost_estimate=cost,
        )(x_flat, w_in, b2d)

    try:
        logits_p, probs_p = run(single_buffer_resident=True)
    except Exception:
        # Fallback if single-buffered resident specs (pl.Buffered(1)) are rejected.
        logits_p, probs_p = run(single_buffer_resident=False)

    # Slice away the lane padding just outside the kernel (keep adjacent to the call).
    return logits_p[:, :N], probs_p[:, :N]


if __name__ == "__main__":
    # Small shapes consistent with the (B, C, H, W) forward contract.
    B, C, H, W = 2, 4, 16, 16
    NUM_CLASSES = 10
    FEAT = C * H * W

    key = jax.random.PRNGKey(0)
    kx, kw, kb = jax.random.split(key, 3)

    # Deterministic synthetic parameters (no checkpoint loading).
    x = jax.random.normal(kx, (B, C, H, W), dtype=jnp.float32)
    weight = jax.random.normal(kw, (FEAT, NUM_CLASSES), dtype=jnp.float32) * 0.02
    bias = jax.random.normal(kb, (NUM_CLASSES,), dtype=jnp.float32) * 0.01

    logits, probs = base_model_forward(x, weight, bias)
    jax.block_until_ready((logits, probs))

    assert logits.shape == (B, NUM_CLASSES)
    assert probs.shape == (B, NUM_CLASSES)

    # Reference 1: same bf16-rounded matmul inputs, f32 accumulation (tight tolerance).
    xb = x.reshape(B, FEAT).astype(jnp.bfloat16).astype(jnp.float32)
    wb = weight.astype(jnp.bfloat16).astype(jnp.float32)
    ref_logits_bf16 = xb @ wb + bias
    ref_probs_bf16 = jax.nn.softmax(ref_logits_bf16, axis=-1)
    assert jnp.allclose(logits, ref_logits_bf16, atol=2e-3, rtol=2e-3)
    assert jnp.allclose(probs, ref_probs_bf16, atol=2e-3, rtol=2e-3)

    # Reference 2: full-f32 model semantics (looser tolerance for bf16 rounding).
    ref_logits = x.reshape(B, FEAT) @ weight + bias
    ref_probs = jax.nn.softmax(ref_logits, axis=-1)
    assert jnp.allclose(logits, ref_logits, atol=3e-2, rtol=3e-2)
    assert jnp.allclose(probs, ref_probs, atol=1e-2, rtol=1e-2)

    # Exercise the K-tiled (feature-split) fallback path, including a ragged last K block.
    logits_k, probs_k = base_model_forward(x, weight, bias, block_b=B, block_k=384)
    jax.block_until_ready((logits_k, probs_k))
    assert logits_k.shape == (B, NUM_CLASSES)
    assert probs_k.shape == (B, NUM_CLASSES)
    assert jnp.allclose(logits_k, ref_logits_bf16, atol=2e-3, rtol=2e-3)
    assert jnp.allclose(probs_k, ref_probs_bf16, atol=2e-3, rtol=2e-3)

    print("KERNEL_OK")
</pallas_src>

<mosaic_0001>
module attributes {stable_mosaic.version = 11 : i64} {
  func.func @_fused_kernel(%arg0: i32, %arg1: memref<2x1024xf32, #tpu.memory_space<vmem>>, %arg2: memref<1024x128xbf16, #tpu.memory_space<vmem>>, %arg3: memref<1x128xf32, #tpu.memory_space<vmem>>, %arg4: memref<2x128xf32, #tpu.memory_space<vmem>>, %arg5: memref<2x128xf32, #tpu.memory_space<vmem>>) attributes {dimension_semantics = [#tpu.dimension_semantics<parallel>], iteration_bounds = array<i64: 1>, scalar_prefetch = 0 : i64, scratch_operands = 0 : i64, tpu.core_type = #tpu.core_type<tc>, window_params = [{transform_indices = @transform_0, window_bounds = array<i64: 2, 1024>}, {pipeline_mode = #tpu.pipeline_mode<synchronous>, transform_indices = @transform_1, window_bounds = array<i64: 1024, 128>}, {pipeline_mode = #tpu.pipeline_mode<synchronous>, transform_indices = @transform_2, window_bounds = array<i64: 1, 128>}, {transform_indices = @transform_3, window_bounds = array<i64: 2, 128>}, {transform_indices = @transform_4, window_bounds = array<i64: 2, 128>}]} {
    %c0 = arith.constant 0 : index
    %c0_0 = arith.constant 0 : index
    %0 = vector.load %arg1[%c0, %c0_0] : memref<2x1024xf32, #tpu.memory_space<vmem>>, vector<2x1024xf32>
    %1 = arith.truncf %0 : vector<2x1024xf32> to vector<2x1024xbf16>
    %c0_1 = arith.constant 0 : index
    %c0_2 = arith.constant 0 : index
    %2 = vector.load %arg2[%c0_1, %c0_2] : memref<1024x128xbf16, #tpu.memory_space<vmem>>, vector<1024x128xbf16>
    %cst = arith.constant dense<0.000000e+00> : vector<2x128xf32>
    %3 = tpu.matmul %1, %2, %cst {dimension_numbers = #tpu.dot_dimension_numbers<[1], [0], [0], [1], [0, 0, 1, 1], [], []>} : vector<2x1024xbf16>, vector<1024x128xbf16>, vector<2x128xf32> -> vector<2x128xf32>
    %c0_3 = arith.constant 0 : index
    %c0_4 = arith.constant 0 : index
    %4 = vector.load %arg3[%c0_3, %c0_4] : memref<1x128xf32, #tpu.memory_space<vmem>>, vector<1x128xf32>
    %5 = vector.broadcast %4 : vector<1x128xf32> to vector<2x128xf32>
    %6 = arith.addf %3, %5 : vector<2x128xf32>
    %c0_5 = arith.constant 0 : index
    %c0_6 = arith.constant 0 : index
    %7 = vector.load %arg4[%c0_5, %c0_6] : memref<2x128xf32, #tpu.memory_space<vmem>>, vector<2x128xf32>
    tpu.vector_store %arg4[%c0_5, %c0_6], %6 {strides = array<i32>} : memref<2x128xf32, #tpu.memory_space<vmem>>, vector<2x128xf32>,
    %cst_7 = arith.constant dense<0xFF800000> : vector<2xf32>
    %8 = vector.multi_reduction <maximumf>, %6, %cst_7 [1] : vector<2x128xf32> to vector<2xf32>
    %9 = vector.shape_cast %8 : vector<2xf32> to vector<2x1xf32>
    %10 = vector.broadcast %9 : vector<2x1xf32> to vector<2x128xf32>
    %11 = arith.subf %6, %10 : vector<2x128xf32>
    %12 = math.exp %11 : vector<2x128xf32>
    %cst_8 = arith.constant dense<0.000000e+00> : vector<2xf32>
    %13 = vector.multi_reduction <add>, %12, %cst_8 [1] : vector<2x128xf32> to vector<2xf32>
    %14 = vector.shape_cast %13 : vector<2xf32> to vector<2x1xf32>
    %15 = tpu.reciprocal %14 {approx = true} : vector<2x1xf32> -> vector<2x1xf32>
    %16 = vector.broadcast %15 : vector<2x1xf32> to vector<2x128xf32>
    %17 = arith.mulf %12, %16 : vector<2x128xf32>
    %c0_9 = arith.constant 0 : index
    %c0_10 = arith.constant 0 : index
    %18 = vector.load %arg5[%c0_9, %c0_10] : memref<2x128xf32, #tpu.memory_space<vmem>>, vector<2x128xf32>
    tpu.vector_store %arg5[%c0_9, %c0_10], %17 {strides = array<i32>} : memref<2x128xf32, #tpu.memory_space<vmem>>, vector<2x128xf32>,
    return
  }
  func.func @transform_0(%arg0: i32) -> (i32, i32) {
    %c0_i32 = arith.constant 0 : i32
    %c0_i32_0 = arith.constant 0 : i32
    return %arg0, %c0_i32 : i32, i32
  }
  func.func @transform_1(%arg0: i32) -> (i32, i32) {
    %c0_i32 = arith.constant 0 : i32
    %c0_i32_0 = arith.constant 0 : i32
    %c0_i32_1 = arith.constant 0 : i32
    return %c0_i32, %c0_i32_0 : i32, i32
  }
  func.func @transform_2(%arg0: i32) -> (i32, i32) {
    %c0_i32 = arith.constant 0 : i32
    %c0_i32_0 = arith.constant 0 : i32
    %c0_i32_1 = arith.constant 0 : i32
    return %c0_i32, %c0_i32_0 : i32, i32
  }
  func.func @transform_3(%arg0: i32) -> (i32, i32) {
    %c0_i32 = arith.constant 0 : i32
    %c0_i32_0 = arith.constant 0 : i32
    return %arg0, %c0_i32 : i32, i32
  }
  func.func @transform_4(%arg0: i32) -> (i32, i32) {
    %c0_i32 = arith.constant 0 : i32
    %c0_i32_0 = arith.constant 0 : i32
    return %arg0, %c0_i32 : i32, i32
  }
}

module attributes {stable_mosaic.version = 11 : i64} {
  func.func @_fused_kernel(%arg0: i32, %arg1: memref<2x1024xf32, #tpu.memory_space<vmem>>, %arg2: memref<1024x128xbf16, #tpu.memory_space<vmem>>, %arg3: memref<1x128xf32, #tpu.memory_space<vmem>>, %arg4: memref<2x128xf32, #tpu.memory_space<vmem>>, %arg5: memref<2x128xf32, #tpu.memory_space<vmem>>) attributes {dimension_semantics = [#tpu.dimension_semantics<parallel>], iteration_bounds = array<i64: 1>, scalar_prefetch = 0 : i64, scratch_operands = 0 : i64, tpu.core_type = #tpu.core_type<tc>, window_params = [{transform_indices = @transform_0, window_bounds = array<i64: 2, 1024>}, {pipeline_mode = #tpu.pipeline_mode<synchronous>, transform_indices = @transform_1, window_bounds = array<i64: 1024, 128>}, {pipeline_mode = #tpu.pipeline_mode<synchronous>, transform_indices = @transform_2, window_bounds = array<i64: 1, 128>}, {transform_indices = @transform_3, window_bounds = array<i64: 2, 128>}, {transform_indices = @transform_4, window_bounds = array<i64: 2, 128>}]} {
    %c0 = arith.constant 0 : index
    %c0_0 = arith.constant 0 : index
    %0 = vector.load %arg1[%c0, %c0_0] : memref<2x1024xf32, #tpu.memory_space<vmem>>, vector<2x1024xf32>
    %1 = arith.truncf %0 : vector<2x1024xf32> to vector<2x1024xbf16>
    %c0_1 = arith.constant 0 : index
    %c0_2 = arith.constant 0 : index
    %2 = vector.load %arg2[%c0_1, %c0_2] : memref<1024x128xbf16, #tpu.memory_space<vmem>>, vector<1024x128xbf16>
    %cst = arith.constant dense<0.000000e+00> : vector<2x128xf32>
    %3 = tpu.matmul %1, %2, %cst {dimension_numbers = #tpu.dot_dimension_numbers<[1], [0], [0], [1], [0, 0, 1, 1], [], []>} : vector<2x1024xbf16>, vector<1024x128xbf16>, vector<2x128xf32> -> vector<2x128xf32>
    %c0_3 = arith.constant 0 : index
    %c0_4 = arith.constant 0 : index
    %4 = vector.load %arg3[%c0_3, %c0_4] : memref<1x128xf32, #tpu.memory_space<vmem>>, vector<1x128xf32>
    %5 = vector.broadcast %4 : vector<1x128xf32> to vector<2x128xf32>
    %6 = arith.addf %3, %5 : vector<2x128xf32>
    %c0_5 = arith.constant 0 : index
    %c0_6 = arith.constant 0 : index
    %7 = vector.load %arg4[%c0_5, %c0_6] : memref<2x128xf32, #tpu.memory_space<vmem>>, vector<2x128xf32>
    tpu.vector_store %arg4[%c0_5, %c0_6], %6 {strides = array<i32>} : memref<2x128xf32, #tpu.memory_space<vmem>>, vector<2x128xf32>,
    %cst_7 = arith.constant dense<0xFF800000> : vector<2xf32>
    %8 = vector.multi_reduction <maximumf>, %6, %cst_7 [1] : vector<2x128xf32> to vector<2xf32>
    %9 = vector.shape_cast %8 : vector<2xf32> to vector<2x1xf32>
    %10 = vector.broadcast %9 : vector<2x1xf32> to vector<2x128xf32>
    %11 = arith.subf %6, %10 : vector<2x128xf32>
    %12 = math.exp %11 : vector<2x128xf32>
    %cst_8 = arith.constant dense<0.000000e+00> : vector<2xf32>
    %13 = vector.multi_reduction <add>, %12, %cst_8 [1] : vector<2x128xf32> to vector<2xf32>
    %14 = vector.shape_cast %13 : vector<2xf32> to vector<2x1xf32>
    %15 = tpu.reciprocal %14 {approx = true} : vector<2x1xf32> -> vector<2x1xf32>
    %16 = vector.broadcast %15 : vector<2x1xf32> to vector<2x128xf32>
    %17 = arith.mulf %12, %16 : vector<2x128xf32>
    %c0_9 = arith.constant 0 : index
    %c0_10 = arith.constant 0 : index
    %18 = vector.load %arg5[%c0_9, %c0_10] : memref<2x128xf32, #tpu.memory_space<vmem>>, vector<2x128xf32>
    tpu.vector_store %arg5[%c0_9, %c0_10], %17 {strides = array<i32>} : memref<2x128xf32, #tpu.memory_space<vmem>>, vector<2x128xf32>,
    return
  }
  func.func @transform_0(%arg0: i32) -> (i32, i32) {
    %c0_i32 = arith.constant 0 : i32
    %c0_i32_0 = arith.constant 0 : i32
    return %arg0, %c0_i32 : i32, i32
  }
  func.func @transform_1(%arg0: i32) -> (i32, i32) {
    %c0_i32 = arith.constant 0 : i32
    %c0_i32_0 = arith.constant 0 : i32
    %c0_i32_1 = arith.constant 0 : i32
    return %c0_i32, %c0_i32_0 : i32, i32
  }
  func.func @transform_2(%arg0: i32) -> (i32, i32) {
    %c0_i32 = arith.constant 0 : i32
    %c0_i32_0 = arith.constant 0 : i32
    %c0_i32_1 = arith.constant 0 : i32
    return %c0_i32, %c0_i32_0 : i32, i32
  }
  func.func @transform_3(%arg0: i32) -> (i32, i32) {
    %c0_i32 = arith.constant 0 : i32
    %c0_i32_0 = arith.constant 0 : i32
    return %arg0, %c0_i32 : i32, i32
  }
  func.func @transform_4(%arg0: i32) -> (i32, i32) {
    %c0_i32 = arith.constant 0 : i32
    %c0_i32_0 = arith.constant 0 : i32
    return %arg0, %c0_i32 : i32, i32
  }
}

</mosaic_0001>

<llo_original>
// kernel: tpu_custom_call.1
$region0: #{tpu_custom_call.1}
  #allocation0 [shape = 'u32[]', space=smem, size = 0x4, offset = 0x4, fixed_abs, tag = 'smem constant byte address 0x4 - core index']
  #allocation1 [shape = 'u32[144,128]{1,0:T(1,128)}', space=vmem, size = 0x12000, scoped, tag = 'internal scratch']
  %s0 = inlined_call_operand.hbm [shape: f32[2,1024], index: 0, kind: input, shape index: {}]
  %s1 = inlined_call_operand.hbm [shape: bf16[1024,128], index: 1, kind: input, shape index: {}]
  %s2 = inlined_call_operand.vmem [shape: f32[1,128], index: 2, kind: input, shape index: {}]
  %s3 = inlined_call_operand.hbm [shape: f32[2,128], index: 3, kind: output, shape index: {0}]
  %s4 = inlined_call_operand.hbm [shape: f32[2,128], index: 4, kind: output, shape index: {1}]
  %5 = xla_tuple %s3, %s4
  %s6 = sld [smem:[#allocation0]]
  $region38: #{tpu_custom_call.1} parent=0
    _
  %s8 = ssub.s32 1, %s6
  %s9 = scalar_select 0, %s8, %s6
  $region1: #{tpu_custom_call.1} parent=0
    #allocation2 [shape = 'u8[8192]{0}', space=vmem, size = 0x2000, scoped, tag = 'input window, operand 0, single buffered']
    #allocation3 [shape = 's32[1]{0}', space=sflag, size = 0x4, scoped, tag = 'scoped memory for tpu_custom_call.1']
    #allocation4 [shape = 's32[1]{0}', space=sflag, size = 0x4, scoped, tag = 'scoped memory for tpu_custom_call.1']
    #allocation5 [shape = 'u8[262144]{0}', space=vmem, size = 0x40000, scoped, tag = 'input window, operand 1, single buffered']
    #allocation6 [shape = 's32[1]{0}', space=sflag, size = 0x4, scoped, tag = 'scoped memory for tpu_custom_call.1']
    #allocation7 [shape = 'u8[1024]{0}', space=vmem, size = 0x400, scoped, tag = 'output window, operand 0, single buffered']
    #allocation8 [shape = 'u8[1024]{0}', space=vmem, size = 0x400, scoped, tag = 'output window, operand 1, single buffered']
    #allocation9 [shape = 's32[1]{0}', space=sflag, size = 0x4, scoped, tag = 'scoped memory for tpu_custom_call.1']
    %10 = vsyncpa [#allocation3], 0
    %11 = vsyncpa [#allocation6], 0
    %12 = vsyncpa [#allocation4], 0
    %13 = vsyncpa [#allocation9], 0
    // Predicated region
    $region2: #{tpu_custom_call.1} parent=1 // pred_check
      _
    $region3: #{tpu_custom_call.1} parent=1 // pred_check_branch
      %15 = sbr.rel (0) target = $region5
    $region4: #{tpu_custom_call.1} parent=1 // pred_region
      %s17 = ssub.s32 256, 256
      %18 = vsyncadd [#allocation3], %s17
      %s20 = sshll.u32 [#allocation2], 4
      %s21 = int_to_ptr.vmem [resolvable:$true] %s20
      %23 = dma.hbm_to_vmem [thread:$0]  %s0, 256, %s21, [#allocation3]
    $region5: #{tpu_custom_call.1} parent=1 // pred_fallthru
      _
    // Predicated region
    $region6: #{tpu_custom_call.1} parent=1 // pred_check
      _
    $region7: #{tpu_custom_call.1} parent=1 // pred_check_branch
      %25 = sbr.rel (0) target = $region9
    $region8: #{tpu_custom_call.1} parent=1 // pred_region
      %s27 = ssub.s32 8192, 8192
      %28 = vsyncadd [#allocation6], %s27
      %s29 = sshll.u32 [#allocation5], 4
      %s30 = int_to_ptr.vmem [resolvable:$true] %s29
      %35 = dma.hbm_to_vmem [thread:$0]  %s1, 8192, %s30, [#allocation6], 64, 64, 4
    $region9: #{tpu_custom_call.1} parent=1 // pred_fallthru
      _
    // Predicated region
    $region10: #{tpu_custom_call.1} parent=1 // pred_check
      _
    $region11: #{tpu_custom_call.1} parent=1 // pred_check_branch
      %37 = sbr.rel (0) target = $region13
    $region12: #{tpu_custom_call.1} parent=1 // pred_region
      _
    $region13: #{tpu_custom_call.1} parent=1 // pred_fallthru
      _
    // Predicated region
    $region14: #{tpu_custom_call.1} parent=1 // pred_check
      _
    $region15: #{tpu_custom_call.1} parent=1 // pred_check_branch
      %39 = sbr.rel (0) target = $region17
    $region16: #{tpu_custom_call.1} parent=1 // pred_region
      %40 = dma.done [#allocation3], 256
    $region17: #{tpu_custom_call.1} parent=1 // pred_fallthru
      _
    // Predicated region
    $region18: #{tpu_custom_call.1} parent=1 // pred_check
      _
    $region19: #{tpu_custom_call.1} parent=1 // pred_check_branch
      %42 = sbr.rel (0) target = $region21
    $region20: #{tpu_custom_call.1} parent=1 // pred_region
      %43 = dma.done [#allocation6], 8192
    $region21: #{tpu_custom_call.1} parent=1 // pred_fallthru
      _
    %v45 = vld [vmem:[#allocation2] sm:$0xff]
    %v46 = vld [vmem:[#allocation2 + $0x8] sm:$0xff]
    %v49 = vcombine.high %v45, %v45
    %v51 = vunpack.c.l.s4 1983009808
    %v52 = vunpack.c.0.s8 %v51
    %v53 = vlaneseq
    %v54 = vshrl.u32 %v53, 7
    %v55 = vsub.s32 %v52, %v54
    %v56 = vrot.slane %v45, %v55
    %v58 = vunpack.c.l.s4 1983009808
    %v59 = vunpack.c.0.s8 %v58
    %v60 = vlaneseq
    %v61 = vshrl.u32 %v60, 7
    %v62 = vsub.s32 %v59, %v61
    %v63 = vrot.slane %v49, %v62
    %v64 = vcombine.high %v56, %v56
    %v65 = vcombine.high %v63, %v63
    %v66 = vcombine.high %v46, %v46
    %v68 = vunpack.c.l.s4 1983009808
    %v69 = vunpack.c.0.s8 %v68
    %v70 = vlaneseq
    %v71 = vshrl.u32 %v70, 7
    %v72 = vsub.s32 %v69, %v71
    %v73 = vrot.slane %v46, %v72
    %v75 = vunpack.c.l.s4 1983009808
    %v76 = vunpack.c.0.s8 %v75
    %v77 = vlaneseq
    %v78 = vshrl.u32 %v77, 7
    %v79 = vsub.s32 %v76, %v78
    %v80 = vrot.slane %v66, %v79
    %v81 = vcombine.high %v73, %v73
    %v82 = vcombine.high %v80, %v80
    %v91 = vpack.c.bf16 %v56, %v56
    %v92 = vpack.c.bf16 %v64, %v64
    %v93 = vpack.c.bf16 %v63, %v63
    %v94 = vpack.c.bf16 %v65, %v65
    %v95 = vpack.c.bf16 %v73, %v73
    %v96 = vpack.c.bf16 %v81, %v81
    %v97 = vpack.c.bf16 %v80, %v80
    %v98 = vpack.c.bf16 %v82, %v82
    %v99 = vld [vmem:[#allocation5] sm:$0xf]
    %v100 = vld [vmem:[#allocation5 + $0x4] sm:$0xf]
    %v101 = vld [vmem:[#allocation5 + $0x8] sm:$0xf]
    %v102 = vld [vmem:[#allocation5 + $0xc] sm:$0xf]
    %v103 = vld [vmem:[#allocation5 + $0x10] sm:$0xf]
    %v104 = vld [vmem:[#allocation5 + $0x14] sm:$0xf]
    %v105 = vld [vmem:[#allocation5 + $0x18] sm:$0xf]
    %v106 = vld [vmem:[#allocation5 + $0x1c] sm:$0xf]
    %v107 = vld [vmem:[#allocation5 + $0x20] sm:$0xf]
    %v108 = vld [vmem:[#allocation5 + $0x24] sm:$0xf]
    %v109 = vld [vmem:[#allocation5 + $0x28] sm:$0xf]
    %v110 = vld [vmem:[#allocation5 + $0x2c] sm:$0xf]
    %v111 = vld [vmem:[#allocation5 + $0x30] sm:$0xf]
    %v112 = vld [vmem:[#allocation5 + $0x34] sm:$0xf]
    %v113 = vld [vmem:[#allocation5 + $0x38] sm:$0xf]
    %v114 = vld [vmem:[#allocation5 + $0x3c] sm:$0xf]
    %v115 = vld [vmem:[#allocation5 + $0x40] sm:$0xf]
    %v116 = vld [vmem:[#allocation5 + $0x44] sm:$0xf]
    %v117 = vld [vmem:[#allocation5 + $0x48] sm:$0xf]
    %v118 = vld [vmem:[#allocation5 + $0x4c] sm:$0xf]
    %v119 = vld [vmem:[#allocation5 + $0x50] sm:$0xf]
    %v120 = vld [vmem:[#allocation5 + $0x54] sm:$0xf]
    %v121 = vld [vmem:[#allocation5 + $0x58] sm:$0xf]
    %v122 = vld [vmem:[#allocation5 + $0x5c] sm:$0xf]
    %v123 = vld [vmem:[#allocation5 + $0x60] sm:$0xf]
    %v124 = vld [vmem:[#allocation5 + $0x64] sm:$0xf]
    %v125 = vld [vmem:[#allocation5 + $0x68] sm:$0xf]
    %v126 = vld [vmem:[#allocation5 + $0x6c] sm:$0xf]
    %v127 = vld [vmem:[#allocation5 + $0x70] sm:$0xf]
    %v128 = vld [vmem:[#allocation5 + $0x74] sm:$0xf]
    %v129 = vld [vmem:[#allocation5 + $0x78] sm:$0xf]
    %v130 = vld [vmem:[#allocation5 + $0x7c] sm:$0xf]
    %v131 = vld [vmem:[#allocation5 + $0x80] sm:$0xf]
    %v132 = vld [vmem:[#allocation5 + $0x84] sm:$0xf]
    %v133 = vld [vmem:[#allocation5 + $0x88] sm:$0xf]
    %v134 = vld [vmem:[#allocation5 + $0x8c] sm:$0xf]
    %v135 = vld [vmem:[#allocation5 + $0x90] sm:$0xf]
    %v136 = vld [vmem:[#allocation5 + $0x94] sm:$0xf]
    %v137 = vld [vmem:[#allocation5 + $0x98] sm:$0xf]
    %v138 = vld [vmem:[#allocation5 + $0x9c] sm:$0xf]
    %v139 = vld [vmem:[#allocation5 + $0xa0] sm:$0xf]
    %v140 = vld [vmem:[#allocation5 + $0xa4] sm:$0xf]
    %v141 = vld [vmem:[#allocation5 + $0xa8] sm:$0xf]
    %v142 = vld [vmem:[#allocation5 + $0xac] sm:$0xf]
    %v143 = vld [vmem:[#allocation5 + $0xb0] sm:$0xf]
    %v144 = vld [vmem:[#allocation5 + $0xb4] sm:$0xf]
    %v145 = vld [vmem:[#allocation5 + $0xb8] sm:$0xf]
    %v146 = vld [vmem:[#allocation5 + $0xbc] sm:$0xf]
    %v147 = vld [vmem:[#allocation5 + $0xc0] sm:$0xf]
    %v148 = vld [vmem:[#allocation5 + $0xc4] sm:$0xf]
    %v149 = vld [vmem:[#allocation5 + $0xc8] sm:$0xf]
    %v150 = vld [vmem:[#allocation5 + $0xcc] sm:$0xf]
    %v151 = vld [vmem:[#allocation5 + $0xd0] sm:$0xf]
    %v152 = vld [vmem:[#allocation5 + $0xd4] sm:$0xf]
    %v153 = vld [vmem:[#allocation5 + $0xd8] sm:$0xf]
    %v154 = vld [vmem:[#allocation5 + $0xdc] sm:$0xf]
    %v155 = vld [vmem:[#allocation5 + $0xe0] sm:$0xf]
    %v156 = vld [vmem:[#allocation5 + $0xe4] sm:$0xf]
    %v157 = vld [vmem:[#allocation5 + $0xe8] sm:$0xf]
    %v158 = vld [vmem:[#allocation5 + $0xec] sm:$0xf]
    %v159 = vld [vmem:[#allocation5 + $0xf0] sm:$0xf]
    %v160 = vld [vmem:[#allocation5 + $0xf4] sm:$0xf]
    %v161 = vld [vmem:[#allocation5 + $0xf8] sm:$0xf]
    %v162 = vld [vmem:[#allocation5 + $0xfc] sm:$0xf]
    %v163 = vld [vmem:[#allocation5 + $0x100] sm:$0xf]
    %v164 = vld [vmem:[#allocation5 + $0x104] sm:$0xf]
    %v165 = vld [vmem:[#allocation5 + $0x108] sm:$0xf]
    %v166 = vld [vmem:[#allocation5 + $0x10c] sm:$0xf]
    %v167 = vld [vmem:[#allocation5 + $0x110] sm:$0xf]
    %v168 = vld [vmem:[#allocation5 + $0x114] sm:$0xf]
    %v169 = vld [vmem:[#allocation5 + $0x118] sm:$0xf]
    %v170 = vld [vmem:[#allocation5 + $0x11c] sm:$0xf]
    %v171 = vld [vmem:[#allocation5 + $0x120] sm:$0xf]
    %v172 = vld [vmem:[#allocation5 + $0x124] sm:$0xf]
    %v173 = vld [vmem:[#allocation5 + $0x128] sm:$0xf]
    %v174 = vld [vmem:[#allocation5 + $0x12c] sm:$0xf]
    %v175 = vld [vmem:[#allocation5 + $0x130] sm:$0xf]
    %v176 = vld [vmem:[#allocation5 + $0x134] sm:$0xf]
    %v177 = vld [vmem:[#allocation5 + $0x138] sm:$0xf]
    %v178 = vld [vmem:[#allocation5 + $0x13c] sm:$0xf]
    %v179 = vld [vmem:[#allocation5 + $0x140] sm:$0xf]
    %v180 = vld [vmem:[#allocation5 + $0x144] sm:$0xf]
    %v181 = vld [vmem:[#allocation5 + $0x148] sm:$0xf]
    %v182 = vld [vmem:[#allocation5 + $0x14c] sm:$0xf]
    %v183 = vld [vmem:[#allocation5 + $0x150] sm:$0xf]
    %v184 = vld [vmem:[#allocation5 + $0x154] sm:$0xf]
    %v185 = vld [vmem:[#allocation5 + $0x158] sm:$0xf]
    %v186 = vld [vmem:[#allocation5 + $0x15c] sm:$0xf]
    %v187 = vld [vmem:[#allocation5 + $0x160] sm:$0xf]
    %v188 = vld [vmem:[#allocation5 + $0x164] sm:$0xf]
    %v189 = vld [vmem:[#allocation5 + $0x168] sm:$0xf]
    %v190 = vld [vmem:[#allocation5 + $0x16c] sm:$0xf]
    %v191 = vld [vmem:[#allocation5 + $0x170] sm:$0xf]
    %v192 = vld [vmem:[#allocation5 + $0x174] sm:$0xf]
    %v193 = vld [vmem:[#allocation5 + $0x178] sm:$0xf]
    %v194 = vld [vmem:[#allocation5 + $0x17c] sm:$0xf]
    %v195 = vld [vmem:[#allocation5 + $0x180] sm:$0xf]
    %v196 = vld [vmem:[#allocation5 + $0x184] sm:$0xf]
    %v197 = vld [vmem:[#allocation5 + $0x188] sm:$0xf]
    %v198 = vld [vmem:[#allocation5 + $0x18c] sm:$0xf]
    %v199 = vld [vmem:[#allocation5 + $0x190] sm:$0xf]
    %v200 = vld [vmem:[#allocation5 + $0x194] sm:$0xf]
    %v201 = vld [vmem:[#allocation5 + $0x198] sm:$0xf]
    %v202 = vld [vmem:[#allocation5 + $0x19c] sm:$0xf]
    %v203 = vld [vmem:[#allocation5 + $0x1a0] sm:$0xf]
    %v204 = vld [vmem:[#allocation5 + $0x1a4] sm:$0xf]
    %v205 = vld [vmem:[#allocation5 + $0x1a8] sm:$0xf]
    %v206 = vld [vmem:[#allocation5 + $0x1ac] sm:$0xf]
    %v207 = vld [vmem:[#allocation5 + $0x1b0] sm:$0xf]
    %v208 = vld [vmem:[#allocation5 + $0x1b4] sm:$0xf]
    %v209 = vld [vmem:[#allocation5 + $0x1b8] sm:$0xf]
    %v210 = vld [vmem:[#allocation5 + $0x1bc] sm:$0xf]
    %v211 = vld [vmem:[#allocation5 + $0x1c0] sm:$0xf]
    %v212 = vld [vmem:[#allocation5 + $0x1c4] sm:$0xf]
    %v213 = vld [vmem:[#allocation5 + $0x1c8] sm:$0xf]
    %v214 = vld [vmem:[#allocation5 + $0x1cc] sm:$0xf]
    %v215 = vld [vmem:[#allocation5 + $0x1d0] sm:$0xf]
    %v216 = vld [vmem:[#allocation5 + $0x1d4] sm:$0xf]
    %v217 = vld [vmem:[#allocation5 + $0x1d8] sm:$0xf]
    %v218 = vld [vmem:[#allocation5 + $0x1dc] sm:$0xf]
    %v219 = vld [vmem:[#allocation5 + $0x1e0] sm:$0xf]
    %v220 = vld [vmem:[#allocation5 + $0x1e4] sm:$0xf]
    %v221 = vld [vmem:[#allocation5 + $0x1e8] sm:$0xf]
    %v222 = vld [vmem:[#allocation5 + $0x1ec] sm:$0xf]
    %v223 = vld [vmem:[#allocation5 + $0x1f0] sm:$0xf]
    %v224 = vld [vmem:[#allocation5 + $0x1f4] sm:$0xf]
    %v225 = vld [vmem:[#allocation5 + $0x1f8] sm:$0xf]
    %v226 = vld [vmem:[#allocation5 + $0x1fc] sm:$0xf]
    %v227 = vld [vmem:[%s2] sm:$0x1]
    %v229 = vlaneseq
    %v230 = vshrl.u32 %v229, 7
    %v231 = vsub.s32 0, %v230
    %v232 = vrot.slane %v227, %v231
    %v362 = vunpack.c.l.b16 %v99
    %v363 = vunpack.c.l.b16 %v100
    %v364 = vunpack.c.l.b16 %v101
    %v365 = vunpack.c.l.b16 %v102
    %v366 = vunpack.c.l.b16 %v103
    %v367 = vunpack.c.l.b16 %v104
    %v368 = vunpack.c.l.b16 %v105
    %v369 = vunpack.c.l.b16 %v106
    %v370 = vunpack.c.l.b16 %v107
    %v371 = vunpack.c.l.b16 %v108
    %v372 = vunpack.c.l.b16 %v109
    %v373 = vunpack.c.l.b16 %v110
    %v374 = vunpack.c.l.b16 %v111
    %v375 = vunpack.c.l.b16 %v112
    %v376 = vunpack.c.l.b16 %v113
    %v377 = vunpack.c.l.b16 %v114
    %v378 = vunpack.c.l.b16 %v115
    %v379 = vunpack.c.l.b16 %v116
    %v380 = vunpack.c.l.b16 %v117
    %v381 = vunpack.c.l.b16 %v118
    %v382 = vunpack.c.l.b16 %v119
    %v383 = vunpack.c.l.b16 %v120
    %v384 = vunpack.c.l.b16 %v121
    %v385 = vunpack.c.l.b16 %v122
    %v386 = vunpack.c.l.b16 %v123
    %v387 = vunpack.c.l.b16 %v124
    %v388 = vunpack.c.l.b16 %v125
    %v389 = vunpack.c.l.b16 %v126
    %v390 = vunpack.c.l.b16 %v127
    %v391 = vunpack.c.l.b16 %v128
    %v392 = vunpack.c.l.b16 %v129
    %v393 = vunpack.c.l.b16 %v130
    %v394 = vunpack.c.l.b16 %v131
    %v395 = vunpack.c.l.b16 %v132
    %v396 = vunpack.c.l.b16 %v133
    %v397 = vunpack.c.l.b16 %v134
    %v398 = vunpack.c.l.b16 %v135
    %v399 = vunpack.c.l.b16 %v136
    %v400 = vunpack.c.l.b16 %v137
    %v401 = vunpack.c.l.b16 %v138
    %v402 = vunpack.c.l.b16 %v139
    %v403 = vunpack.c.l.b16 %v140
    %v404 = vunpack.c.l.b16 %v141
    %v405 = vunpack.c.l.b16 %v142
    %v406 = vunpack.c.l.b16 %v143
    %v407 = vunpack.c.l.b16 %v144
    %v408 = vunpack.c.l.b16 %v145
    %v409 = vunpack.c.l.b16 %v146
    %v410 = vunpack.c.l.b16 %v147
    %v411 = vunpack.c.l.b16 %v148
    %v412 = vunpack.c.l.b16 %v149
    %v413 = vunpack.c.l.b16 %v150
    %v414 = vunpack.c.l.b16 %v151
    %v415 = vunpack.c.l.b16 %v152
    %v416 = vunpack.c.l.b16 %v153
    %v417 = vunpack.c.l.b16 %v154
    %v418 = vunpack.c.l.b16 %v155
    %v419 = vunpack.c.l.b16 %v156
    %v420 = vunpack.c.l.b16 %v157
    %v421 = vunpack.c.l.b16 %v158
    %v422 = vunpack.c.l.b16 %v159
    %v423 = vunpack.c.l.b16 %v160
    %v424 = vunpack.c.l.b16 %v161
    %v425 = vunpack.c.l.b16 %v162
    %v426 = vunpack.c.l.b16 %v163
    %v427 = vunpack.c.l.b16 %v164
    %v428 = vunpack.c.l.b16 %v165
    %v429 = vunpack.c.l.b16 %v166
    %v430 = vunpack.c.l.b16 %v167
    %v431 = vunpack.c.l.b16 %v168
    %v432 = vunpack.c.l.b16 %v169
    %v433 = vunpack.c.l.b16 %v170
    %v434 = vunpack.c.l.b16 %v171
    %v435 = vunpack.c.l.b16 %v172
    %v436 = vunpack.c.l.b16 %v173
    %v437 = vunpack.c.l.b16 %v174
    %v438 = vunpack.c.l.b16 %v175
    %v439 = vunpack.c.l.b16 %v176
    %v440 = vunpack.c.l.b16 %v177
    %v441 = vunpack.c.l.b16 %v178
    %v442 = vunpack.c.l.b16 %v179
    %v443 = vunpack.c.l.b16 %v180
    %v444 = vunpack.c.l.b16 %v181
    %v445 = vunpack.c.l.b16 %v182
    %v446 = vunpack.c.l.b16 %v183
    %v447 = vunpack.c.l.b16 %v184
    %v448 = vunpack.c.l.b16 %v185
    %v449 = vunpack.c.l.b16 %v186
    %v450 = vunpack.c.l.b16 %v187
    %v451 = vunpack.c.l.b16 %v188
    %v452 = vunpack.c.l.b16 %v189
    %v453 = vunpack.c.l.b16 %v190
    %v454 = vunpack.c.l.b16 %v191
    %v455 = vunpack.c.l.b16 %v192
    %v456 = vunpack.c.l.b16 %v193
    %v457 = vunpack.c.l.b16 %v194
    %v458 = vunpack.c.l.b16 %v195
    %v459 = vunpack.c.l.b16 %v196
    %v460 = vunpack.c.l.b16 %v197
    %v461 = vunpack.c.l.b16 %v198
    %v462 = vunpack.c.l.b16 %v199
    %v463 = vunpack.c.l.b16 %v200
    %v464 = vunpack.c.l.b16 %v201
    %v465 = vunpack.c.l.b16 %v202
    %v466 = vunpack.c.l.b16 %v203
    %v467 = vunpack.c.l.b16 %v204
    %v468 = vunpack.c.l.b16 %v205
    %v469 = vunpack.c.l.b16 %v206
    %v470 = vunpack.c.l.b16 %v207
    %v471 = vunpack.c.l.b16 %v208
    %v472 = vunpack.c.l.b16 %v209
    %v473 = vunpack.c.l.b16 %v210
    %v474 = vunpack.c.l.b16 %v211
    %v475 = vunpack.c.l.b16 %v212
    %v476 = vunpack.c.l.b16 %v213
    %v477 = vunpack.c.l.b16 %v214
    %v478 = vunpack.c.l.b16 %v215
    %v479 = vunpack.c.l.b16 %v216
    %v480 = vunpack.c.l.b16 %v217
    %v481 = vunpack.c.l.b16 %v218
    %v482 = vunpack.c.l.b16 %v219
    %v483 = vunpack.c.l.b16 %v220
    %v484 = vunpack.c.l.b16 %v221
    %v485 = vunpack.c.l.b16 %v222
    %v486 = vunpack.c.l.b16 %v223
    %v487 = vunpack.c.l.b16 %v224
    %v488 = vunpack.c.l.b16 %v225
    %v489 = vunpack.c.l.b16 %v226
    %v490 = vpack.c.b16 %v363, %v362
    %v491 = vpack.c.b16 %v365, %v364
    %v492 = vpack.c.b16 %v367, %v366
    %v493 = vpack.c.b16 %v369, %v368
    %v494 = vpack.c.b16 %v371, %v370
    %v495 = vpack.c.b16 %v373, %v372
    %v496 = vpack.c.b16 %v375, %v374
    %v497 = vpack.c.b16 %v377, %v376
    %v498 = vpack.c.b16 %v379, %v378
    %v499 = vpack.c.b16 %v381, %v380
    %v500 = vpack.c.b16 %v383, %v382
    %v501 = vpack.c.b16 %v385, %v384
    %v502 = vpack.c.b16 %v387, %v386
    %v503 = vpack.c.b16 %v389, %v388
    %v504 = vpack.c.b16 %v391, %v390
    %v505 = vpack.c.b16 %v393, %v392
    %v506 = vpack.c.b16 %v395, %v394
    %v507 = vpack.c.b16 %v397, %v396
    %v508 = vpack.c.b16 %v399, %v398
    %v509 = vpack.c.b16 %v401, %v400
    %v510 = vpack.c.b16 %v403, %v402
    %v511 = vpack.c.b16 %v405, %v404
    %v512 = vpack.c.b16 %v407, %v406
    %v513 = vpack.c.b16 %v409, %v408
    %v514 = vpack.c.b16 %v411, %v410
    %v515 = vpack.c.b16 %v413, %v412
    %v516 = vpack.c.b16 %v415, %v414
    %v517 = vpack.c.b16 %v417, %v416
    %v518 = vpack.c.b16 %v419, %v418
    %v519 = vpack.c.b16 %v421, %v420
    %v520 = vpack.c.b16 %v423, %v422
    %v521 = vpack.c.b16 %v425, %v424
    %v522 = vpack.c.b16 %v427, %v426
    %v523 = vpack.c.b16 %v429, %v428
    %v524 = vpack.c.b16 %v431, %v430
    %v525 = vpack.c.b16 %v433, %v432
    %v526 = vpack.c.b16 %v435, %v434
    %v527 = vpack.c.b16 %v437, %v436
    %v528 = vpack.c.b16 %v439, %v438
    %v529 = vpack.c.b16 %v441, %v440
    %v530 = vpack.c.b16 %v443, %v442
    %v531 = vpack.c.b16 %v445, %v444
    %v532 = vpack.c.b16 %v447, %v446
    %v533 = vpack.c.b16 %v449, %v448
    %v534 = vpack.c.b16 %v451, %v450
    %v535 = vpack.c.b16 %v453, %v452
    %v536 = vpack.c.b16 %v455, %v454
    %v537 = vpack.c.b16 %v457, %v456
    %v538 = vpack.c.b16 %v459, %v458
    %v539 = vpack.c.b16 %v461, %v460
    %v540 = vpack.c.b16 %v463, %v462
    %v541 = vpack.c.b16 %v465, %v464
    %v542 = vpack.c.b16 %v467, %v466
    %v543 = vpack.c.b16 %v469, %v468
    %v544 = vpack.c.b16 %v471, %v470
    %v545 = vpack.c.b16 %v473, %v472
    %v546 = vpack.c.b16 %v475, %v474
    %v547 = vpack.c.b16 %v477, %v476
    %v548 = vpack.c.b16 %v479, %v478
    %v549 = vpack.c.b16 %v481, %v480
    %v550 = vpack.c.b16 %v483, %v482
    %v551 = vpack.c.b16 %v485, %v484
    %v552 = vpack.c.b16 %v487, %v486
    %v553 = vpack.c.b16 %v489, %v488
    %618 = vmatprep.subr.bf16.mxu0 0
    %619 = vmatpush1.bf16.msra.mxu0 %v497
    %620 = vmatprep.subr.bf16.mxu0 0
    %621 = vmatpush1.bf16.msra.mxu0 %v496
    %622 = vmatprep.subr.bf16.mxu0 0
    %623 = vmatpush1.bf16.msra.mxu0 %v495
    %624 = vmatprep.subr.bf16.mxu0 0
    %625 = vmatpush1.bf16.msra.mxu0 %v494
    %626 = vmatprep.subr.bf16.mxu0 0
    %627 = vmatpush1.bf16.msra.mxu0 %v493
    %628 = vmatprep.subr.bf16.mxu0 0
    %629 = vmatpush1.bf16.msra.mxu0 %v492
    %630 = vmatprep.subr.bf16.mxu0 0
    %631 = vmatpush1.bf16.msra.mxu0 %v491
    %632 = vmatprep.subr.bf16.mxu0 0
    %633 = vmatpush1.bf16.msra.mxu0 %v490
    %634 = vmatprep.subr.bf16.mxu0 0
    %635 = vmatpush2.bf16.msra.mxu0 %v505
    %636 = vmatprep.subr.bf16.mxu0 0
    %637 = vmatpush2.bf16.msra.mxu0 %v504
    %638 = vmatprep.subr.bf16.mxu0 0
    %639 = vmatpush2.bf16.msra.mxu0 %v503
    %640 = vmatprep.subr.bf16.mxu0 0
    %641 = vmatpush2.bf16.msra.mxu0 %v502
    %642 = vmatprep.subr.bf16.mxu0 0
    %643 = vmatpush2.bf16.msra.mxu0 %v501
    %644 = vmatprep.subr.bf16.mxu0 0
    %645 = vmatpush2.bf16.msra.mxu0 %v500
    %646 = vmatprep.subr.bf16.mxu0 0
    %647 = vmatpush2.bf16.msra.mxu0 %v499
    %648 = vmatprep.subr.bf16.mxu0 0
    %649 = vmatpush2.bf16.msra.mxu0 %v498
    %650 = vmatprep.mubr.bf16.mxu0 %v92
    %651 = vmatmul.mubr.bf16.gmra.mxu0 %v91
    %v652 = vpop.f32.mrf.mxu0
    %v653 = vadd.f32 %v232, %v652
    %v654 = vpop.f32.mrf.mxu0
    %v655 = vpop.f32.mrf.mxu0
    %v656 = vpop.f32.mrf.mxu0
    %657 = vdwg.mxu0
    %658 = vmatprep.subr.bf16.mxu0 0
    %659 = vmatpush1.bf16.msra.mxu0 %v513
    %660 = vmatprep.subr.bf16.mxu0 0
    %661 = vmatpush1.bf16.msra.mxu0 %v512
    %662 = vmatprep.subr.bf16.mxu0 0
    %663 = vmatpush1.bf16.msra.mxu0 %v511
    %664 = vmatprep.subr.bf16.mxu0 0
    %665 = vmatpush1.bf16.msra.mxu0 %v510
    %666 = vmatprep.subr.bf16.mxu0 0
    %667 = vmatpush1.bf16.msra.mxu0 %v509
    %668 = vmatprep.subr.bf16.mxu0 0
    %669 = vmatpush1.bf16.msra.mxu0 %v508
    %670 = vmatprep.subr.bf16.mxu0 0
    %671 = vmatpush1.bf16.msra.mxu0 %v507
    %672 = vmatprep.subr.bf16.mxu0 0
    %673 = vmatpush1.bf16.msra.mxu0 %v506
    %674 = vmatprep.subr.bf16.mxu0 0
    %675 = vmatpush2.bf16.msra.mxu0 %v521
    %676 = vmatprep.subr.bf16.mxu0 0
    %677 = vmatpush2.bf16.msra.mxu0 %v520
    %678 = vmatprep.subr.bf16.mxu0 0
    %679 = vmatpush2.bf16.msra.mxu0 %v519
    %680 = vmatprep.subr.bf16.mxu0 0
    %681 = vmatpush2.bf16.msra.mxu0 %v518
    %682 = vmatprep.subr.bf16.mxu0 0
    %683 = vmatpush2.bf16.msra.mxu0 %v517
    %684 = vmatprep.subr.bf16.mxu0 0
    %685 = vmatpush2.bf16.msra.mxu0 %v516
    %686 = vmatprep.subr.bf16.mxu0 0
    %687 = vmatpush2.bf16.msra.mxu0 %v515
    %688 = vmatprep.subr.bf16.mxu0 0
    %689 = vmatpush2.bf16.msra.mxu0 %v514
    %690 = vmatprep.mubr.bf16.mxu0 %v94
    %691 = vmatmul.mubr.bf16.gmra.mxu0 %v93
    %v692 = vpop.f32.mrf.mxu0
    %v693 = vadd.f32 %v653, %v692
    %v694 = vpop.f32.mrf.mxu0
    %v695 = vpop.f32.mrf.mxu0
    %v696 = vpop.f32.mrf.mxu0
    %697 = vdwg.mxu0
    %698 = vmatprep.subr.bf16.mxu0 0
    %699 = vmatpush1.bf16.msra.mxu0 %v529
    %700 = vmatprep.subr.bf16.mxu0 0
    %701 = vmatpush1.bf16.msra.mxu0 %v528
    %702 = vmatprep.subr.bf16.mxu0 0
    %703 = vmatpush1.bf16.msra.mxu0 %v527
    %704 = vmatprep.subr.bf16.mxu0 0
    %705 = vmatpush1.bf16.msra.mxu0 %v526
    %706 = vmatprep.subr.bf16.mxu0 0
    %707 = vmatpush1.bf16.msra.mxu0 %v525
    %708 = vmatprep.subr.bf16.mxu0 0
    %709 = vmatpush1.bf16.msra.mxu0 %v524
    %710 = vmatprep.subr.bf16.mxu0 0
    %711 = vmatpush1.bf16.msra.mxu0 %v523
    %712 = vmatprep.subr.bf16.mxu0 0
    %713 = vmatpush1.bf16.msra.mxu0 %v522
    %714 = vmatprep.subr.bf16.mxu0 0
    %715 = vmatpush2.bf16.msra.mxu0 %v537
    %716 = vmatprep.subr.bf16.mxu0 0
    %717 = vmatpush2.bf16.msra.mxu0 %v536
    %718 = vmatprep.subr.bf16.mxu0 0
    %719 = vmatpush2.bf16.msra.mxu0 %v535
    %720 = vmatprep.subr.bf16.mxu0 0
    %721 = vmatpush2.bf16.msra.mxu0 %v534
    %722 = vmatprep.subr.bf16.mxu0 0
    %723 = vmatpush2.bf16.msra.mxu0 %v533
    %724 = vmatprep.subr.bf16.mxu0 0
    %725 = vmatpush2.bf16.msra.mxu0 %v532
    %726 = vmatprep.subr.bf16.mxu0 0
    %727 = vmatpush2.bf16.msra.mxu0 %v531
    %728 = vmatprep.subr.bf16.mxu0 0
    %729 = vmatpush2.bf16.msra.mxu0 %v530
    %730 = vmatprep.mubr.bf16.mxu0 %v96
    %731 = vmatmul.mubr.bf16.gmra.mxu0 %v95
    %v732 = vpop.f32.mrf.mxu0
    %v733 = vadd.f32 %v693, %v732
    %v734 = vpop.f32.mrf.mxu0
    %v735 = vpop.f32.mrf.mxu0
    %v736 = vpop.f32.mrf.mxu0
    %737 = vdwg.mxu0
    %738 = vmatprep.subr.bf16.mxu0 0
    %739 = vmatpush1.bf16.msra.mxu0 %v545
    %740 = vmatprep.subr.bf16.mxu0 0
    %741 = vmatpush1.bf16.msra.mxu0 %v544
    %742 = vmatprep.subr.bf16.mxu0 0
    %743 = vmatpush1.bf16.msra.mxu0 %v543
    %744 = vmatprep.subr.bf16.mxu0 0
    %745 = vmatpush1.bf16.msra.mxu0 %v542
    %746 = vmatprep.subr.bf16.mxu0 0
    %747 = vmatpush1.bf16.msra.mxu0 %v541
    %748 = vmatprep.subr.bf16.mxu0 0
    %749 = vmatpush1.bf16.msra.mxu0 %v540
    %750 = vmatprep.subr.bf16.mxu0 0
    %751 = vmatpush1.bf16.msra.mxu0 %v539
    %752 = vmatprep.subr.bf16.mxu0 0
    %753 = vmatpush1.bf16.msra.mxu0 %v538
    %754 = vmatprep.subr.bf16.mxu0 0
    %755 = vmatpush2.bf16.msra.mxu0 %v553
    %756 = vmatprep.subr.bf16.mxu0 0
    %757 = vmatpush2.bf16.msra.mxu0 %v552
    %758 = vmatprep.subr.bf16.mxu0 0
    %759 = vmatpush2.bf16.msra.mxu0 %v551
    %760 = vmatprep.subr.bf16.mxu0 0
    %761 = vmatpush2.bf16.msra.mxu0 %v550
    %762 = vmatprep.subr.bf16.mxu0 0
    %763 = vmatpush2.bf16.msra.mxu0 %v549
    %764 = vmatprep.subr.bf16.mxu0 0
    %765 = vmatpush2.bf16.msra.mxu0 %v548
    %766 = vmatprep.subr.bf16.mxu0 0
    %767 = vmatpush2.bf16.msra.mxu0 %v547
    %768 = vmatprep.subr.bf16.mxu0 0
    %769 = vmatpush2.bf16.msra.mxu0 %v546
    %770 = vmatprep.mubr.bf16.mxu0 %v98
    %771 = vmatmul.mubr.bf16.gmra.mxu0 %v97
    %v772 = vpop.f32.mrf.mxu0
    %v773 = vadd.f32 %v733, %v772
    %v774 = vpop.f32.mrf.mxu0
    %v775 = vpop.f32.mrf.mxu0
    %v776 = vpop.f32.mrf.mxu0
    %777 = vdwg.mxu0
    %778 = vst [vmem:[#allocation7] sm:$0x3] %v773
    %vm779 = vcmask 1041408
    %v780 = vsel %vm779, %v773, -inf
    %781 = vmax.xlane.f32.xlu0 %v780
    %v782 = vpop.xlane.xlu0 %781
    %v783 = vsub.f32 %v773, %v782
    %v784 = vmul.f32 %v783, 1.442695
    %v785 = vpow.pop %v784
    %v786 = vsel %vm779, %v785, 0.0
    %787 = vadd.xlane.f32.xlu0 %v786
    %v788 = vpop.xlane.xlu0 %787
    %v789 = vrcp.pop %v788
    %v790 = vmul.f32 %v785, %v789
    %791 = vst [vmem:[#allocation8] sm:$0x3] %v790
    // Predicated region
    $region22: #{tpu_custom_call.1} parent=1 // pred_check
      _
    $region23: #{tpu_custom_call.1} parent=1 // pred_check_branch
      %793 = sbr.rel (0) target = $region25
    $region24: #{tpu_custom_call.1} parent=1 // pred_region
      %s795 = ssub.s32 32, 32
      %796 = vsyncadd [#allocation4], %s795
      %s798 = sshll.u32 [#allocation7], 4
      %s799 = int_to_ptr.vmem [resolvable:$true] %s798
      %801 = dma.vmem_to_hbm [thread:$0]  %s799, 32, %s3, [#allocation4]
    $region25: #{tpu_custom_call.1} parent=1 // pred_fallthru
      _
    // Predicated region
    $region26: #{tpu_custom_call.1} parent=1 // pred_check
      _
    $region27: #{tpu_custom_call.1} parent=1 // pred_check_branch
      %803 = sbr.rel (0) target = $region29
    $region28: #{tpu_custom_call.1} parent=1 // pred_region
      %s805 = ssub.s32 32, 32
      %806 = vsyncadd [#allocation9], %s805
      %s808 = sshll.u32 [#allocation8], 4
      %s809 = int_to_ptr.vmem [resolvable:$true] %s808
      %811 = dma.vmem_to_hbm [thread:$0]  %s809, 32, %s4, [#allocation9]
    $region29: #{tpu_custom_call.1} parent=1 // pred_fallthru
      _
    // Predicated region
    $region30: #{tpu_custom_call.1} parent=1 // pred_check
      _
    $region31: #{tpu_custom_call.1} parent=1 // pred_check_branch
      %813 = sbr.rel (0) target = $region33
    $region32: #{tpu_custom_call.1} parent=1 // pred_region
      %814 = dma.done [#allocation4], 32
    $region33: #{tpu_custom_call.1} parent=1 // pred_fallthru
      _
    // Predicated region
    $region34: #{tpu_custom_call.1} parent=1 // pred_check
      _
    $region35: #{tpu_custom_call.1} parent=1 // pred_check_branch
      %816 = sbr.rel (0) target = $region37
    $region36: #{tpu_custom_call.1} parent=1 // pred_region
      %817 = dma.done [#allocation9], 32
    $region37: #{tpu_custom_call.1} parent=1 // pred_fallthru
      _
    %818 = vsyncpa [#allocation3], 1
    %819 = vsyncpa [#allocation6], 1
    %820 = vsyncpa [#allocation4], 1
    %821 = vsyncpa [#allocation9], 1

// kernel: tpu_custom_call.1
$region0: #{tpu_custom_call.1}
  #allocation0 [shape = 'u32[]', space=smem, size = 0x4, offset = 0x4, fixed_abs, tag = 'smem constant byte address 0x4 - core index']
  #allocation1 [shape = 'u32[144,128]{1,0:T(1,128)}', space=vmem, size = 0x12000, scoped, tag = 'internal scratch']
  %s0 = inlined_call_operand.hbm [shape: f32[2,1024], index: 0, kind: input, shape index: {}]
  %s1 = inlined_call_operand.hbm [shape: bf16[1024,128], index: 1, kind: input, shape index: {}]
  %s2 = inlined_call_operand.vmem [shape: f32[1,128], index: 2, kind: input, shape index: {}]
  %s3 = inlined_call_operand.hbm [shape: f32[2,128], index: 3, kind: output, shape index: {0}]
  %s4 = inlined_call_operand.hbm [shape: f32[2,128], index: 4, kind: output, shape index: {1}]
  %5 = xla_tuple %s3, %s4
  %s6 = sld [smem:[#allocation0]]
  $region38: #{tpu_custom_call.1} parent=0
    _
  %s8 = ssub.s32 1, %s6
  %s9 = scalar_select 0, %s8, %s6
  $region1: #{tpu_custom_call.1} parent=0
    #allocation2 [shape = 'u8[8192]{0}', space=vmem, size = 0x2000, scoped, tag = 'input window, operand 0, single buffered']
    #allocation3 [shape = 's32[1]{0}', space=sflag, size = 0x4, scoped, tag = 'scoped memory for tpu_custom_call.1']
    #allocation4 [shape = 's32[1]{0}', space=sflag, size = 0x4, scoped, tag = 'scoped memory for tpu_custom_call.1']
    #allocation5 [shape = 'u8[262144]{0}', space=vmem, size = 0x40000, scoped, tag = 'input window, operand 1, single buffered']
    #allocation6 [shape = 's32[1]{0}', space=sflag, size = 0x4, scoped, tag = 'scoped memory for tpu_custom_call.1']
    #allocation7 [shape = 'u8[1024]{0}', space=vmem, size = 0x400, scoped, tag = 'output window, operand 0, single buffered']
    #allocation8 [shape = 'u8[1024]{0}', space=vmem, size = 0x400, scoped, tag = 'output window, operand 1, single buffered']
    #allocation9 [shape = 's32[1]{0}', space=sflag, size = 0x4, scoped, tag = 'scoped memory for tpu_custom_call.1']
    %10 = vsyncpa [#allocation3], 0
    %11 = vsyncpa [#allocation6], 0
    %12 = vsyncpa [#allocation4], 0
    %13 = vsyncpa [#allocation9], 0
    // Predicated region
    $region2: #{tpu_custom_call.1} parent=1 // pred_check
      _
    $region3: #{tpu_custom_call.1} parent=1 // pred_check_branch
      %15 = sbr.rel (0) target = $region5
    $region4: #{tpu_custom_call.1} parent=1 // pred_region
      %s17 = ssub.s32 256, 256
      %18 = vsyncadd [#allocation3], %s17
      %s20 = sshll.u32 [#allocation2], 4
      %s21 = int_to_ptr.vmem [resolvable:$true] %s20
      %23 = dma.hbm_to_vmem [thread:$0]  %s0, 256, %s21, [#allocation3]
    $region5: #{tpu_custom_call.1} parent=1 // pred_fallthru
      _
    // Predicated region
    $region6: #{tpu_custom_call.1} parent=1 // pred_check
      _
    $region7: #{tpu_custom_call.1} parent=1 // pred_check_branch
      %25 = sbr.rel (0) target = $region9
    $region8: #{tpu_custom_call.1} parent=1 // pred_region
      %s27 = ssub.s32 8192, 8192
      %28 = vsyncadd [#allocation6], %s27
      %s29 = sshll.u32 [#allocation5], 4
      %s30 = int_to_ptr.vmem [resolvable:$true] %s29
      %35 = dma.hbm_to_vmem [thread:$0]  %s1, 8192, %s30, [#allocation6], 64, 64, 4
    $region9: #{tpu_custom_call.1} parent=1 // pred_fallthru
      _
    // Predicated region
    $region10: #{tpu_custom_call.1} parent=1 // pred_check
      _
    $region11: #{tpu_custom_call.1} parent=1 // pred_check_branch
      %37 = sbr.rel (0) target = $region13
    $region12: #{tpu_custom_call.1} parent=1 // pred_region
      _
    $region13: #{tpu_custom_call.1} parent=1 // pred_fallthru
      _
    // Predicated region
    $region14: #{tpu_custom_call.1} parent=1 // pred_check
      _
    $region15: #{tpu_custom_call.1} parent=1 // pred_check_branch
      %39 = sbr.rel (0) target = $region17
    $region16: #{tpu_custom_call.1} parent=1 // pred_region
      %40 = dma.done [#allocation3], 256
    $region17: #{tpu_custom_call.1} parent=1 // pred_fallthru
      _
    // Predicated region
    $region18: #{tpu_custom_call.1} parent=1 // pred_check
      _
    $region19: #{tpu_custom_call.1} parent=1 // pred_check_branch
      %42 = sbr.rel (0) target = $region21
    $region20: #{tpu_custom_call.1} parent=1 // pred_region
      %43 = dma.done [#allocation6], 8192
    $region21: #{tpu_custom_call.1} parent=1 // pred_fallthru
      _
    %v45 = vld [vmem:[#allocation2] sm:$0xff]
    %v46 = vld [vmem:[#allocation2 + $0x8] sm:$0xff]
    %v49 = vcombine.high %v45, %v45
    %v51 = vunpack.c.l.s4 1983009808
    %v52 = vunpack.c.0.s8 %v51
    %v53 = vlaneseq
    %v54 = vshrl.u32 %v53, 7
    %v55 = vsub.s32 %v52, %v54
    %v56 = vrot.slane %v45, %v55
    %v58 = vunpack.c.l.s4 1983009808
    %v59 = vunpack.c.0.s8 %v58
    %v60 = vlaneseq
    %v61 = vshrl.u32 %v60, 7
    %v62 = vsub.s32 %v59, %v61
    %v63 = vrot.slane %v49, %v62
    %v64 = vcombine.high %v56, %v56
    %v65 = vcombine.high %v63, %v63
    %v66 = vcombine.high %v46, %v46
    %v68 = vunpack.c.l.s4 1983009808
    %v69 = vunpack.c.0.s8 %v68
    %v70 = vlaneseq
    %v71 = vshrl.u32 %v70, 7
    %v72 = vsub.s32 %v69, %v71
    %v73 = vrot.slane %v46, %v72
    %v75 = vunpack.c.l.s4 1983009808
    %v76 = vunpack.c.0.s8 %v75
    %v77 = vlaneseq
    %v78 = vshrl.u32 %v77, 7
    %v79 = vsub.s32 %v76, %v78
    %v80 = vrot.slane %v66, %v79
    %v81 = vcombine.high %v73, %v73
    %v82 = vcombine.high %v80, %v80
    %v91 = vpack.c.bf16 %v56, %v56
    %v92 = vpack.c.bf16 %v64, %v64
    %v93 = vpack.c.bf16 %v63, %v63
    %v94 = vpack.c.bf16 %v65, %v65
    %v95 = vpack.c.bf16 %v73, %v73
    %v96 = vpack.c.bf16 %v81, %v81
    %v97 = vpack.c.bf16 %v80, %v80
    %v98 = vpack.c.bf16 %v82, %v82
    %v99 = vld [vmem:[#allocation5] sm:$0xf]
    %v100 = vld [vmem:[#allocation5 + $0x4] sm:$0xf]
    %v101 = vld [vmem:[#allocation5 + $0x8] sm:$0xf]
    %v102 = vld [vmem:[#allocation5 + $0xc] sm:$0xf]
    %v103 = vld [vmem:[#allocation5 + $0x10] sm:$0xf]
    %v104 = vld [vmem:[#allocation5 + $0x14] sm:$0xf]
    %v105 = vld [vmem:[#allocation5 + $0x18] sm:$0xf]
    %v106 = vld [vmem:[#allocation5 + $0x1c] sm:$0xf]
    %v107 = vld [vmem:[#allocation5 + $0x20] sm:$0xf]
    %v108 = vld [vmem:[#allocation5 + $0x24] sm:$0xf]
    %v109 = vld [vmem:[#allocation5 + $0x28] sm:$0xf]
    %v110 = vld [vmem:[#allocation5 + $0x2c] sm:$0xf]
    %v111 = vld [vmem:[#allocation5 + $0x30] sm:$0xf]
    %v112 = vld [vmem:[#allocation5 + $0x34] sm:$0xf]
    %v113 = vld [vmem:[#allocation5 + $0x38] sm:$0xf]
    %v114 = vld [vmem:[#allocation5 + $0x3c] sm:$0xf]
    %v115 = vld [vmem:[#allocation5 + $0x40] sm:$0xf]
    %v116 = vld [vmem:[#allocation5 + $0x44] sm:$0xf]
    %v117 = vld [vmem:[#allocation5 + $0x48] sm:$0xf]
    %v118 = vld [vmem:[#allocation5 + $0x4c] sm:$0xf]
    %v119 = vld [vmem:[#allocation5 + $0x50] sm:$0xf]
    %v120 = vld [vmem:[#allocation5 + $0x54] sm:$0xf]
    %v121 = vld [vmem:[#allocation5 + $0x58] sm:$0xf]
    %v122 = vld [vmem:[#allocation5 + $0x5c] sm:$0xf]
    %v123 = vld [vmem:[#allocation5 + $0x60] sm:$0xf]
    %v124 = vld [vmem:[#allocation5 + $0x64] sm:$0xf]
    %v125 = vld [vmem:[#allocation5 + $0x68] sm:$0xf]
    %v126 = vld [vmem:[#allocation5 + $0x6c] sm:$0xf]
    %v127 = vld [vmem:[#allocation5 + $0x70] sm:$0xf]
    %v128 = vld [vmem:[#allocation5 + $0x74] sm:$0xf]
    %v129 = vld [vmem:[#allocation5 + $0x78] sm:$0xf]
    %v130 = vld [vmem:[#allocation5 + $0x7c] sm:$0xf]
    %v131 = vld [vmem:[#allocation5 + $0x80] sm:$0xf]
    %v132 = vld [vmem:[#allocation5 + $0x84] sm:$0xf]
    %v133 = vld [vmem:[#allocation5 + $0x88] sm:$0xf]
    %v134 = vld [vmem:[#allocation5 + $0x8c] sm:$0xf]
    %v135 = vld [vmem:[#allocation5 + $0x90] sm:$0xf]
    %v136 = vld [vmem:[#allocation5 + $0x94] sm:$0xf]
    %v137 = vld [vmem:[#allocation5 + $0x98] sm:$0xf]
    %v138 = vld [vmem:[#allocation5 + $0x9c] sm:$0xf]
    %v139 = vld [vmem:[#allocation5 + $0xa0] sm:$0xf]
    %v140 = vld [vmem:[#allocation5 + $0xa4] sm:$0xf]
    %v141 = vld [vmem:[#allocation5 + $0xa8] sm:$0xf]
    %v142 = vld [vmem:[#allocation5 + $0xac] sm:$0xf]
    %v143 = vld [vmem:[#allocation5 + $0xb0] sm:$0xf]
    %v144 = vld [vmem:[#allocation5 + $0xb4] sm:$0xf]
    %v145 = vld [vmem:[#allocation5 + $0xb8] sm:$0xf]
    %v146 = vld [vmem:[#allocation5 + $0xbc] sm:$0xf]
    %v147 = vld [vmem:[#allocation5 + $0xc0] sm:$0xf]
    %v148 = vld [vmem:[#allocation5 + $0xc4] sm:$0xf]
    %v149 = vld [vmem:[#allocation5 + $0xc8] sm:$0xf]
    %v150 = vld [vmem:[#allocation5 + $0xcc] sm:$0xf]
    %v151 = vld [vmem:[#allocation5 + $0xd0] sm:$0xf]
    %v152 = vld [vmem:[#allocation5 + $0xd4] sm:$0xf]
    %v153 = vld [vmem:[#allocation5 + $0xd8] sm:$0xf]
    %v154 = vld [vmem:[#allocation5 + $0xdc] sm:$0xf]
    %v155 = vld [vmem:[#allocation5 + $0xe0] sm:$0xf]
    %v156 = vld [vmem:[#allocation5 + $0xe4] sm:$0xf]
    %v157 = vld [vmem:[#allocation5 + $0xe8] sm:$0xf]
    %v158 = vld [vmem:[#allocation5 + $0xec] sm:$0xf]
    %v159 = vld [vmem:[#allocation5 + $0xf0] sm:$0xf]
    %v160 = vld [vmem:[#allocation5 + $0xf4] sm:$0xf]
    %v161 = vld [vmem:[#allocation5 + $0xf8] sm:$0xf]
    %v162 = vld [vmem:[#allocation5 + $0xfc] sm:$0xf]
    %v163 = vld [vmem:[#allocation5 + $0x100] sm:$0xf]
    %v164 = vld [vmem:[#allocation5 + $0x104] sm:$0xf]
    %v165 = vld [vmem:[#allocation5 + $0x108] sm:$0xf]
    %v166 = vld [vmem:[#allocation5 + $0x10c] sm:$0xf]
    %v167 = vld [vmem:[#allocation5 + $0x110] sm:$0xf]
    %v168 = vld [vmem:[#allocation5 + $0x114] sm:$0xf]
    %v169 = vld [vmem:[#allocation5 + $0x118] sm:$0xf]
    %v170 = vld [vmem:[#allocation5 + $0x11c] sm:$0xf]
    %v171 = vld [vmem:[#allocation5 + $0x120] sm:$0xf]
    %v172 = vld [vmem:[#allocation5 + $0x124] sm:$0xf]
    %v173 = vld [vmem:[#allocation5 + $0x128] sm:$0xf]
    %v174 = vld [vmem:[#allocation5 + $0x12c] sm:$0xf]
    %v175 = vld [vmem:[#allocation5 + $0x130] sm:$0xf]
    %v176 = vld [vmem:[#allocation5 + $0x134] sm:$0xf]
    %v177 = vld [vmem:[#allocation5 + $0x138] sm:$0xf]
    %v178 = vld [vmem:[#allocation5 + $0x13c] sm:$0xf]
    %v179 = vld [vmem:[#allocation5 + $0x140] sm:$0xf]
    %v180 = vld [vmem:[#allocation5 + $0x144] sm:$0xf]
    %v181 = vld [vmem:[#allocation5 + $0x148] sm:$0xf]
    %v182 = vld [vmem:[#allocation5 + $0x14c] sm:$0xf]
    %v183 = vld [vmem:[#allocation5 + $0x150] sm:$0xf]
    %v184 = vld [vmem:[#allocation5 + $0x154] sm:$0xf]
    %v185 = vld [vmem:[#allocation5 + $0x158] sm:$0xf]
    %v186 = vld [vmem:[#allocation5 + $0x15c] sm:$0xf]
    %v187 = vld [vmem:[#allocation5 + $0x160] sm:$0xf]
    %v188 = vld [vmem:[#allocation5 + $0x164] sm:$0xf]
    %v189 = vld [vmem:[#allocation5 + $0x168] sm:$0xf]
    %v190 = vld [vmem:[#allocation5 + $0x16c] sm:$0xf]
    %v191 = vld [vmem:[#allocation5 + $0x170] sm:$0xf]
    %v192 = vld [vmem:[#allocation5 + $0x174] sm:$0xf]
    %v193 = vld [vmem:[#allocation5 + $0x178] sm:$0xf]
    %v194 = vld [vmem:[#allocation5 + $0x17c] sm:$0xf]
    %v195 = vld [vmem:[#allocation5 + $0x180] sm:$0xf]
    %v196 = vld [vmem:[#allocation5 + $0x184] sm:$0xf]
    %v197 = vld [vmem:[#allocation5 + $0x188] sm:$0xf]
    %v198 = vld [vmem:[#allocation5 + $0x18c] sm:$0xf]
    %v199 = vld [vmem:[#allocation5 + $0x190] sm:$0xf]
    %v200 = vld [vmem:[#allocation5 + $0x194] sm:$0xf]
    %v201 = vld [vmem:[#allocation5 + $0x198] sm:$0xf]
    %v202 = vld [vmem:[#allocation5 + $0x19c] sm:$0xf]
    %v203 = vld [vmem:[#allocation5 + $0x1a0] sm:$0xf]
    %v204 = vld [vmem:[#allocation5 + $0x1a4] sm:$0xf]
    %v205 = vld [vmem:[#allocation5 + $0x1a8] sm:$0xf]
    %v206 = vld [vmem:[#allocation5 + $0x1ac] sm:$0xf]
    %v207 = vld [vmem:[#allocation5 + $0x1b0] sm:$0xf]
    %v208 = vld [vmem:[#allocation5 + $0x1b4] sm:$0xf]
    %v209 = vld [vmem:[#allocation5 + $0x1b8] sm:$0xf]
    %v210 = vld [vmem:[#allocation5 + $0x1bc] sm:$0xf]
    %v211 = vld [vmem:[#allocation5 + $0x1c0] sm:$0xf]
    %v212 = vld [vmem:[#allocation5 + $0x1c4] sm:$0xf]
    %v213 = vld [vmem:[#allocation5 + $0x1c8] sm:$0xf]
    %v214 = vld [vmem:[#allocation5 + $0x1cc] sm:$0xf]
    %v215 = vld [vmem:[#allocation5 + $0x1d0] sm:$0xf]
    %v216 = vld [vmem:[#allocation5 + $0x1d4] sm:$0xf]
    %v217 = vld [vmem:[#allocation5 + $0x1d8] sm:$0xf]
    %v218 = vld [vmem:[#allocation5 + $0x1dc] sm:$0xf]
    %v219 = vld [vmem:[#allocation5 + $0x1e0] sm:$0xf]
    %v220 = vld [vmem:[#allocation5 + $0x1e4] sm:$0xf]
    %v221 = vld [vmem:[#allocation5 + $0x1e8] sm:$0xf]
    %v222 = vld [vmem:[#allocation5 + $0x1ec] sm:$0xf]
    %v223 = vld [vmem:[#allocation5 + $0x1f0] sm:$0xf]
    %v224 = vld [vmem:[#allocation5 + $0x1f4] sm:$0xf]
    %v225 = vld [vmem:[#allocation5 + $0x1f8] sm:$0xf]
    %v226 = vld [vmem:[#allocation5 + $0x1fc] sm:$0xf]
    %v227 = vld [vmem:[%s2] sm:$0x1]
    %v229 = vlaneseq
    %v230 = vshrl.u32 %v229, 7
    %v231 = vsub.s32 0, %v230
    %v232 = vrot.slane %v227, %v231
    %v362 = vunpack.c.l.b16 %v99
    %v363 = vunpack.c.l.b16 %v100
    %v364 = vunpack.c.l.b16 %v101
    %v365 = vunpack.c.l.b16 %v102
    %v366 = vunpack.c.l.b16 %v103
    %v367 = vunpack.c.l.b16 %v104
    %v368 = vunpack.c.l.b16 %v105
    %v369 = vunpack.c.l.b16 %v106
    %v370 = vunpack.c.l.b16 %v107
    %v371 = vunpack.c.l.b16 %v108
    %v372 = vunpack.c.l.b16 %v109
    %v373 = vunpack.c.l.b16 %v110
    %v374 = vunpack.c.l.b16 %v111
    %v375 = vunpack.c.l.b16 %v112
    %v376 = vunpack.c.l.b16 %v113
    %v377 = vunpack.c.l.b16 %v114
    %v378 = vunpack.c.l.b16 %v115
    %v379 = vunpack.c.l.b16 %v116
    %v380 = vunpack.c.l.b16 %v117
    %v381 = vunpack.c.l.b16 %v118
    %v382 = vunpack.c.l.b16 %v119
    %v383 = vunpack.c.l.b16 %v120
    %v384 = vunpack.c.l.b16 %v121
    %v385 = vunpack.c.l.b16 %v122
    %v386 = vunpack.c.l.b16 %v123
    %v387 = vunpack.c.l.b16 %v124
    %v388 = vunpack.c.l.b16 %v125
    %v389 = vunpack.c.l.b16 %v126
    %v390 = vunpack.c.l.b16 %v127
    %v391 = vunpack.c.l.b16 %v128
    %v392 = vunpack.c.l.b16 %v129
    %v393 = vunpack.c.l.b16 %v130
    %v394 = vunpack.c.l.b16 %v131
    %v395 = vunpack.c.l.b16 %v132
    %v396 = vunpack.c.l.b16 %v133
    %v397 = vunpack.c.l.b16 %v134
    %v398 = vunpack.c.l.b16 %v135
    %v399 = vunpack.c.l.b16 %v136
    %v400 = vunpack.c.l.b16 %v137
    %v401 = vunpack.c.l.b16 %v138
    %v402 = vunpack.c.l.b16 %v139
    %v403 = vunpack.c.l.b16 %v140
    %v404 = vunpack.c.l.b16 %v141
    %v405 = vunpack.c.l.b16 %v142
    %v406 = vunpack.c.l.b16 %v143
    %v407 = vunpack.c.l.b16 %v144
    %v408 = vunpack.c.l.b16 %v145
    %v409 = vunpack.c.l.b16 %v146
    %v410 = vunpack.c.l.b16 %v147
    %v411 = vunpack.c.l.b16 %v148
    %v412 = vunpack.c.l.b16 %v149
    %v413 = vunpack.c.l.b16 %v150
    %v414 = vunpack.c.l.b16 %v151
    %v415 = vunpack.c.l.b16 %v152
    %v416 = vunpack.c.l.b16 %v153
    %v417 = vunpack.c.l.b16 %v154
    %v418 = vunpack.c.l.b16 %v155
    %v419 = vunpack.c.l.b16 %v156
    %v420 = vunpack.c.l.b16 %v157
    %v421 = vunpack.c.l.b16 %v158
    %v422 = vunpack.c.l.b16 %v159
    %v423 = vunpack.c.l.b16 %v160
    %v424 = vunpack.c.l.b16 %v161
    %v425 = vunpack.c.l.b16 %v162
    %v426 = vunpack.c.l.b16 %v163
    %v427 = vunpack.c.l.b16 %v164
    %v428 = vunpack.c.l.b16 %v165
    %v429 = vunpack.c.l.b16 %v166
    %v430 = vunpack.c.l.b16 %v167
    %v431 = vunpack.c.l.b16 %v168
    %v432 = vunpack.c.l.b16 %v169
    %v433 = vunpack.c.l.b16 %v170
    %v434 = vunpack.c.l.b16 %v171
    %v435 = vunpack.c.l.b16 %v172
    %v436 = vunpack.c.l.b16 %v173
    %v437 = vunpack.c.l.b16 %v174
    %v438 = vunpack.c.l.b16 %v175
    %v439 = vunpack.c.l.b16 %v176
    %v440 = vunpack.c.l.b16 %v177
    %v441 = vunpack.c.l.b16 %v178
    %v442 = vunpack.c.l.b16 %v179
    %v443 = vunpack.c.l.b16 %v180
    %v444 = vunpack.c.l.b16 %v181
    %v445 = vunpack.c.l.b16 %v182
    %v446 = vunpack.c.l.b16 %v183
    %v447 = vunpack.c.l.b16 %v184
    %v448 = vunpack.c.l.b16 %v185
    %v449 = vunpack.c.l.b16 %v186
    %v450 = vunpack.c.l.b16 %v187
    %v451 = vunpack.c.l.b16 %v188
    %v452 = vunpack.c.l.b16 %v189
    %v453 = vunpack.c.l.b16 %v190
    %v454 = vunpack.c.l.b16 %v191
    %v455 = vunpack.c.l.b16 %v192
    %v456 = vunpack.c.l.b16 %v193
    %v457 = vunpack.c.l.b16 %v194
    %v458 = vunpack.c.l.b16 %v195
    %v459 = vunpack.c.l.b16 %v196
    %v460 = vunpack.c.l.b16 %v197
    %v461 = vunpack.c.l.b16 %v198
    %v462 = vunpack.c.l.b16 %v199
    %v463 = vunpack.c.l.b16 %v200
    %v464 = vunpack.c.l.b16 %v201
    %v465 = vunpack.c.l.b16 %v202
    %v466 = vunpack.c.l.b16 %v203
    %v467 = vunpack.c.l.b16 %v204
    %v468 = vunpack.c.l.b16 %v205
    %v469 = vunpack.c.l.b16 %v206
    %v470 = vunpack.c.l.b16 %v207
    %v471 = vunpack.c.l.b16 %v208
    %v472 = vunpack.c.l.b16 %v209
    %v473 = vunpack.c.l.b16 %v210
    %v474 = vunpack.c.l.b16 %v211
    %v475 = vunpack.c.l.b16 %v212
    %v476 = vunpack.c.l.b16 %v213
    %v477 = vunpack.c.l.b16 %v214
    %v478 = vunpack.c.l.b16 %v215
    %v479 = vunpack.c.l.b16 %v216
    %v480 = vunpack.c.l.b16 %v217
    %v481 = vunpack.c.l.b16 %v218
    %v482 = vunpack.c.l.b16 %v219
    %v483 = vunpack.c.l.b16 %v220
    %v484 = vunpack.c.l.b16 %v221
    %v485 = vunpack.c.l.b16 %v222
    %v486 = vunpack.c.l.b16 %v223
    %v487 = vunpack.c.l.b16 %v224
    %v488 = vunpack.c.l.b16 %v225
    %v489 = vunpack.c.l.b16 %v226
    %v490 = vpack.c.b16 %v363, %v362
    %v491 = vpack.c.b16 %v365, %v364
    %v492 = vpack.c.b16 %v367, %v366
    %v493 = vpack.c.b16 %v369, %v368
    %v494 = vpack.c.b16 %v371, %v370
    %v495 = vpack.c.b16 %v373, %v372
    %v496 = vpack.c.b16 %v375, %v374
    %v497 = vpack.c.b16 %v377, %v376
    %v498 = vpack.c.b16 %v379, %v378
    %v499 = vpack.c.b16 %v381, %v380
    %v500 = vpack.c.b16 %v383, %v382
    %v501 = vpack.c.b16 %v385, %v384
    %v502 = vpack.c.b16 %v387, %v386
    %v503 = vpack.c.b16 %v389, %v388
    %v504 = vpack.c.b16 %v391, %v390
    %v505 = vpack.c.b16 %v393, %v392
    %v506 = vpack.c.b16 %v395, %v394
    %v507 = vpack.c.b16 %v397, %v396
    %v508 = vpack.c.b16 %v399, %v398
    %v509 = vpack.c.b16 %v401, %v400
    %v510 = vpack.c.b16 %v403, %v402
    %v511 = vpack.c.b16 %v405, %v404
    %v512 = vpack.c.b16 %v407, %v406
    %v513 = vpack.c.b16 %v409, %v408
    %v514 = vpack.c.b16 %v411, %v410
    %v515 = vpack.c.b16 %v413, %v412
    %v516 = vpack.c.b16 %v415, %v414
    %v517 = vpack.c.b16 %v417, %v416
    %v518 = vpack.c.b16 %v419, %v418
    %v519 = vpack.c.b16 %v421, %v420
    %v520 = vpack.c.b16 %v423, %v422
    %v521 = vpack.c.b16 %v425, %v424
    %v522 = vpack.c.b16 %v427, %v426
    %v523 = vpack.c.b16 %v429, %v428
    %v524 = vpack.c.b16 %v431, %v430
    %v525 = vpack.c.b16 %v433, %v432
    %v526 = vpack.c.b16 %v435, %v434
    %v527 = vpack.c.b16 %v437, %v436
    %v528 = vpack.c.b16 %v439, %v438
    %v529 = vpack.c.b16 %v441, %v440
    %v530 = vpack.c.b16 %v443, %v442
    %v531 = vpack.c.b16 %v445, %v444
    %v532 = vpack.c.b16 %v447, %v446
    %v533 = vpack.c.b16 %v449, %v448
    %v534 = vpack.c.b16 %v451, %v450
    %v535 = vpack.c.b16 %v453, %v452
    %v536 = vpack.c.b16 %v455, %v454
    %v537 = vpack.c.b16 %v457, %v456
    %v538 = vpack.c.b16 %v459, %v458
    %v539 = vpack.c.b16 %v461, %v460
    %v540 = vpack.c.b16 %v463, %v462
    %v541 = vpack.c.b16 %v465, %v464
    %v542 = vpack.c.b16 %v467, %v466
    %v543 = vpack.c.b16 %v469, %v468
    %v544 = vpack.c.b16 %v471, %v470
    %v545 = vpack.c.b16 %v473, %v472
    %v546 = vpack.c.b16 %v475, %v474
    %v547 = vpack.c.b16 %v477, %v476
    %v548 = vpack.c.b16 %v479, %v478
    %v549 = vpack.c.b16 %v481, %v480
    %v550 = vpack.c.b16 %v483, %v482
    %v551 = vpack.c.b16 %v485, %v484
    %v552 = vpack.c.b16 %v487, %v486
    %v553 = vpack.c.b16 %v489, %v488
    %618 = vmatprep.subr.bf16.mxu0 0
    %619 = vmatpush1.bf16.msra.mxu0 %v497
    %620 = vmatprep.subr.bf16.mxu0 0
    %621 = vmatpush1.bf16.msra.mxu0 %v496
    %622 = vmatprep.subr.bf16.mxu0 0
    %623 = vmatpush1.bf16.msra.mxu0 %v495
    %624 = vmatprep.subr.bf16.mxu0 0
    %625 = vmatpush1.bf16.msra.mxu0 %v494
    %626 = vmatprep.subr.bf16.mxu0 0
    %627 = vmatpush1.bf16.msra.mxu0 %v493
    %628 = vmatprep.subr.bf16.mxu0 0
    %629 = vmatpush1.bf16.msra.mxu0 %v492
    %630 = vmatprep.subr.bf16.mxu0 0
    %631 = vmatpush1.bf16.msra.mxu0 %v491
    %632 = vmatprep.subr.bf16.mxu0 0
    %633 = vmatpush1.bf16.msra.mxu0 %v490
    %634 = vmatprep.subr.bf16.mxu0 0
    %635 = vmatpush2.bf16.msra.mxu0 %v505
    %636 = vmatprep.subr.bf16.mxu0 0
    %637 = vmatpush2.bf16.msra.mxu0 %v504
    %638 = vmatprep.subr.bf16.mxu0 0
    %639 = vmatpush2.bf16.msra.mxu0 %v503
    %640 = vmatprep.subr.bf16.mxu0 0
    %641 = vmatpush2.bf16.msra.mxu0 %v502
    %642 = vmatprep.subr.bf16.mxu0 0
    %643 = vmatpush2.bf16.msra.mxu0 %v501
    %644 = vmatprep.subr.bf16.mxu0 0
    %645 = vmatpush2.bf16.msra.mxu0 %v500
    %646 = vmatprep.subr.bf16.mxu0 0
    %647 = vmatpush2.bf16.msra.mxu0 %v499
    %648 = vmatprep.subr.bf16.mxu0 0
    %649 = vmatpush2.bf16.msra.mxu0 %v498
    %650 = vmatprep.mubr.bf16.mxu0 %v92
    %651 = vmatmul.mubr.bf16.gmra.mxu0 %v91
    %v652 = vpop.f32.mrf.mxu0
    %v653 = vadd.f32 %v232, %v652
    %v654 = vpop.f32.mrf.mxu0
    %v655 = vpop.f32.mrf.mxu0
    %v656 = vpop.f32.mrf.mxu0
    %657 = vdwg.mxu0
    %658 = vmatprep.subr.bf16.mxu0 0
    %659 = vmatpush1.bf16.msra.mxu0 %v513
    %660 = vmatprep.subr.bf16.mxu0 0
    %661 = vmatpush1.bf16.msra.mxu0 %v512
    %662 = vmatprep.subr.bf16.mxu0 0
    %663 = vmatpush1.bf16.msra.mxu0 %v511
    %664 = vmatprep.subr.bf16.mxu0 0
    %665 = vmatpush1.bf16.msra.mxu0 %v510
    %666 = vmatprep.subr.bf16.mxu0 0
    %667 = vmatpush1.bf16.msra.mxu0 %v509
    %668 = vmatprep.subr.bf16.mxu0 0
    %669 = vmatpush1.bf16.msra.mxu0 %v508
    %670 = vmatprep.subr.bf16.mxu0 0
    %671 = vmatpush1.bf16.msra.mxu0 %v507
    %672 = vmatprep.subr.bf16.mxu0 0
    %673 = vmatpush1.bf16.msra.mxu0 %v506
    %674 = vmatprep.subr.bf16.mxu0 0
    %675 = vmatpush2.bf16.msra.mxu0 %v521
    %676 = vmatprep.subr.bf16.mxu0 0
    %677 = vmatpush2.bf16.msra.mxu0 %v520
    %678 = vmatprep.subr.bf16.mxu0 0
    %679 = vmatpush2.bf16.msra.mxu0 %v519
    %680 = vmatprep.subr.bf16.mxu0 0
    %681 = vmatpush2.bf16.msra.mxu0 %v518
    %682 = vmatprep.subr.bf16.mxu0 0
    %683 = vmatpush2.bf16.msra.mxu0 %v517
    %684 = vmatprep.subr.bf16.mxu0 0
    %685 = vmatpush2.bf16.msra.mxu0 %v516
    %686 = vmatprep.subr.bf16.mxu0 0
    %687 = vmatpush2.bf16.msra.mxu0 %v515
    %688 = vmatprep.subr.bf16.mxu0 0
    %689 = vmatpush2.bf16.msra.mxu0 %v514
    %690 = vmatprep.mubr.bf16.mxu0 %v94
    %691 = vmatmul.mubr.bf16.gmra.mxu0 %v93
    %v692 = vpop.f32.mrf.mxu0
    %v693 = vadd.f32 %v653, %v692
    %v694 = vpop.f32.mrf.mxu0
    %v695 = vpop.f32.mrf.mxu0
    %v696 = vpop.f32.mrf.mxu0
    %697 = vdwg.mxu0
    %698 = vmatprep.subr.bf16.mxu0 0
    %699 = vmatpush1.bf16.msra.mxu0 %v529
    %700 = vmatprep.subr.bf16.mxu0 0
    %701 = vmatpush1.bf16.msra.mxu0 %v528
    %702 = vmatprep.subr.bf16.mxu0 0
    %703 = vmatpush1.bf16.msra.mxu0 %v527
    %704 = vmatprep.subr.bf16.mxu0 0
    %705 = vmatpush1.bf16.msra.mxu0 %v526
    %706 = vmatprep.subr.bf16.mxu0 0
    %707 = vmatpush1.bf16.msra.mxu0 %v525
    %708 = vmatprep.subr.bf16.mxu0 0
    %709 = vmatpush1.bf16.msra.mxu0 %v524
    %710 = vmatprep.subr.bf16.mxu0 0
    %711 = vmatpush1.bf16.msra.mxu0 %v523
    %712 = vmatprep.subr.bf16.mxu0 0
    %713 = vmatpush1.bf16.msra.mxu0 %v522
    %714 = vmatprep.subr.bf16.mxu0 0
    %715 = vmatpush2.bf16.msra.mxu0 %v537
    %716 = vmatprep.subr.bf16.mxu0 0
    %717 = vmatpush2.bf16.msra.mxu0 %v536
    %718 = vmatprep.subr.bf16.mxu0 0
    %719 = vmatpush2.bf16.msra.mxu0 %v535
    %720 = vmatprep.subr.bf16.mxu0 0
    %721 = vmatpush2.bf16.msra.mxu0 %v534
    %722 = vmatprep.subr.bf16.mxu0 0
    %723 = vmatpush2.bf16.msra.mxu0 %v533
    %724 = vmatprep.subr.bf16.mxu0 0
    %725 = vmatpush2.bf16.msra.mxu0 %v532
    %726 = vmatprep.subr.bf16.mxu0 0
    %727 = vmatpush2.bf16.msra.mxu0 %v531
    %728 = vmatprep.subr.bf16.mxu0 0
    %729 = vmatpush2.bf16.msra.mxu0 %v530
    %730 = vmatprep.mubr.bf16.mxu0 %v96
    %731 = vmatmul.mubr.bf16.gmra.mxu0 %v95
    %v732 = vpop.f32.mrf.mxu0
    %v733 = vadd.f32 %v693, %v732
    %v734 = vpop.f32.mrf.mxu0
    %v735 = vpop.f32.mrf.mxu0
    %v736 = vpop.f32.mrf.mxu0
    %737 = vdwg.mxu0
    %738 = vmatprep.subr.bf16.mxu0 0
    %739 = vmatpush1.bf16.msra.mxu0 %v545
    %740 = vmatprep.subr.bf16.mxu0 0
    %741 = vmatpush1.bf16.msra.mxu0 %v544
    %742 = vmatprep.subr.bf16.mxu0 0
    %743 = vmatpush1.bf16.msra.mxu0 %v543
    %744 = vmatprep.subr.bf16.mxu0 0
    %745 = vmatpush1.bf16.msra.mxu0 %v542
    %746 = vmatprep.subr.bf16.mxu0 0
    %747 = vmatpush1.bf16.msra.mxu0 %v541
    %748 = vmatprep.subr.bf16.mxu0 0
    %749 = vmatpush1.bf16.msra.mxu0 %v540
    %750 = vmatprep.subr.bf16.mxu0 0
    %751 = vmatpush1.bf16.msra.mxu0 %v539
    %752 = vmatprep.subr.bf16.mxu0 0
    %753 = vmatpush1.bf16.msra.mxu0 %v538
    %754 = vmatprep.subr.bf16.mxu0 0
    %755 = vmatpush2.bf16.msra.mxu0 %v553
    %756 = vmatprep.subr.bf16.mxu0 0
    %757 = vmatpush2.bf16.msra.mxu0 %v552
    %758 = vmatprep.subr.bf16.mxu0 0
    %759 = vmatpush2.bf16.msra.mxu0 %v551
    %760 = vmatprep.subr.bf16.mxu0 0
    %761 = vmatpush2.bf16.msra.mxu0 %v550
    %762 = vmatprep.subr.bf16.mxu0 0
    %763 = vmatpush2.bf16.msra.mxu0 %v549
    %764 = vmatprep.subr.bf16.mxu0 0
    %765 = vmatpush2.bf16.msra.mxu0 %v548
    %766 = vmatprep.subr.bf16.mxu0 0
    %767 = vmatpush2.bf16.msra.mxu0 %v547
    %768 = vmatprep.subr.bf16.mxu0 0
    %769 = vmatpush2.bf16.msra.mxu0 %v546
    %770 = vmatprep.mubr.bf16.mxu0 %v98
    %771 = vmatmul.mubr.bf16.gmra.mxu0 %v97
    %v772 = vpop.f32.mrf.mxu0
    %v773 = vadd.f32 %v733, %v772
    %v774 = vpop.f32.mrf.mxu0
    %v775 = vpop.f32.mrf.mxu0
    %v776 = vpop.f32.mrf.mxu0
    %777 = vdwg.mxu0
    %778 = vst [vmem:[#allocation7] sm:$0x3] %v773
    %vm779 = vcmask 1041408
    %v780 = vsel %vm779, %v773, -inf
    %781 = vmax.xlane.f32.xlu0 %v780
    %v782 = vpop.xlane.xlu0 %781
    %v783 = vsub.f32 %v773, %v782
    %v784 = vmul.f32 %v783, 1.442695
    %v785 = vpow.pop %v784
    %v786 = vsel %vm779, %v785, 0.0
    %787 = vadd.xlane.f32.xlu0 %v786
    %v788 = vpop.xlane.xlu0 %787
    %v789 = vrcp.pop %v788
    %v790 = vmul.f32 %v785, %v789
    %791 = vst [vmem:[#allocation8] sm:$0x3] %v790
    // Predicated region
    $region22: #{tpu_custom_call.1} parent=1 // pred_check
      _
    $region23: #{tpu_custom_call.1} parent=1 // pred_check_branch
      %793 = sbr.rel (0) target = $region25
    $region24: #{tpu_custom_call.1} parent=1 // pred_region
      %s795 = ssub.s32 32, 32
      %796 = vsyncadd [#allocation4], %s795
      %s798 = sshll.u32 [#allocation7], 4
      %s799 = int_to_ptr.vmem [resolvable:$true] %s798
      %801 = dma.vmem_to_hbm [thread:$0]  %s799, 32, %s3, [#allocation4]
    $region25: #{tpu_custom_call.1} parent=1 // pred_fallthru
      _
    // Predicated region
    $region26: #{tpu_custom_call.1} parent=1 // pred_check
      _
    $region27: #{tpu_custom_call.1} parent=1 // pred_check_branch
      %803 = sbr.rel (0) target = $region29
    $region28: #{tpu_custom_call.1} parent=1 // pred_region
      %s805 = ssub.s32 32, 32
      %806 = vsyncadd [#allocation9], %s805
      %s808 = sshll.u32 [#allocation8], 4
      %s809 = int_to_ptr.vmem [resolvable:$true] %s808
      %811 = dma.vmem_to_hbm [thread:$0]  %s809, 32, %s4, [#allocation9]
    $region29: #{tpu_custom_call.1} parent=1 // pred_fallthru
      _
    // Predicated region
    $region30: #{tpu_custom_call.1} parent=1 // pred_check
      _
    $region31: #{tpu_custom_call.1} parent=1 // pred_check_branch
      %813 = sbr.rel (0) target = $region33
    $region32: #{tpu_custom_call.1} parent=1 // pred_region
      %814 = dma.done [#allocation4], 32
    $region33: #{tpu_custom_call.1} parent=1 // pred_fallthru
      _
    // Predicated region
    $region34: #{tpu_custom_call.1} parent=1 // pred_check
      _
    $region35: #{tpu_custom_call.1} parent=1 // pred_check_branch
      %816 = sbr.rel (0) target = $region37
    $region36: #{tpu_custom_call.1} parent=1 // pred_region
      %817 = dma.done [#allocation9], 32
    $region37: #{tpu_custom_call.1} parent=1 // pred_fallthru
      _
    %818 = vsyncpa [#allocation3], 1
    %819 = vsyncpa [#allocation6], 1
    %820 = vsyncpa [#allocation4], 1
    %821 = vsyncpa [#allocation9], 1

</llo_original>
